<compile_context>
chip_gen: v6e
topology: v6e:2x2x1
jax: 0.10.0
libtpu: 0.0.40
codegen_flags: <defaults>
</compile_context>

<pallas_src>
import functools
import itertools

import jax
import jax.numpy as jnp
from jax.experimental import pallas as pl
from jax.experimental.pallas import tpu as pltpu

V = 16    # oracle_vocab_size
D = 128   # repr_size (lane-dense)

# Static tree shape over leaf *slots* (columns of the leaf_ids array), e.g.
# '(left-of((brown, box), (red, square)))' -> balanced tree with 4 leaves.
TREE = ((0, 1), (2, 3))


def plan_tree(tree):
    """Static (trace-time) analysis of the oracle-structure tree.

    Returns (leaf_slots, levels, root_id):
      leaf_slots : list of (node_id, leaf_slot)
      levels     : internal nodes grouped by height, bottom-up; every level is
                   a list of (node_id, left_child_id, right_child_id) and can
                   be evaluated with one stacked matmul.
    """
    leaf_slots = []
    by_height = {}
    counter = itertools.count()

    def go(t):
        nid = next(counter)
        if isinstance(t, tuple):
            # TODO(synk): comp_fn in the PyTorch module may be n-ary; the
            # canonical tanh-linear composition implemented here is binary.
            assert len(t) == 2, "binary composition only"
            l_id, l_h = go(t[0])
            r_id, r_h = go(t[1])
            h = max(l_h, r_h) + 1
            by_height.setdefault(h, []).append((nid, l_id, r_id))
            return nid, h
        leaf_slots.append((nid, int(t)))
        return nid, 0

    root_id, _ = go(tree)
    levels = [by_height[h] for h in sorted(by_height)]
    return leaf_slots, levels, root_id


def tre_kernel(ids_ref, emb_ref, w_ref, rep_ref, out_ref, *,
               leaf_slots, levels, root_id):
    """One batch tile: gather leaves, compose level-by-level, L1 distance."""
    b_tile = rep_ref.shape[0]
    v = emb_ref.shape[0]

    table = emb_ref[...]                    # (V, D)   param dtype
    ids = ids_ref[...]                      # (B_tile, n_leaves) int32
    lane_iota = jax.lax.broadcasted_iota(jnp.int32, (b_tile, v), 1)
    one = jnp.array(1, dtype=table.dtype)
    zero = jnp.array(0, dtype=table.dtype)

    nodes = {}

    # --- Leaf embedding: vectorized one-hot gather (tiny MXU matmul/leaf) ---
    # (OOB token ids -> all-zero one-hot -> zero embedding, never stale VMEM.)
    for node_id, slot in leaf_slots:
        onehot = jnp.where(ids[:, slot:slot + 1] == lane_iota, one, zero)  # (B_tile, V)
        nodes[node_id] = jnp.dot(onehot, table,
                                 preferred_element_type=jnp.float32)       # (B_tile, D) f32

    # --- Level-by-level composition: one fused matmul per tree level ---
    w = w_ref[...]                          # (2D, D) = [W_left; W_right]
    for level in levels:
        xs = [jnp.concatenate([nodes[l], nodes[r]], axis=-1)               # (B_tile, 2D)
              for (_, l, r) in level]
        x = xs[0] if len(xs) == 1 else jnp.concatenate(xs, axis=0)         # (n*B_tile, 2D)
        y = jnp.tanh(jnp.dot(x.astype(w.dtype), w,
                             preferred_element_type=jnp.float32))          # f32
        for i, (node_id, _, _) in enumerate(level):
            nodes[node_id] = y[i * b_tile:(i + 1) * b_tile, :]

    pred = nodes[root_id]                   # (B_tile, D) f32
    # distance_fn: per-tree L1 distance (f32 abs / lane reduction).
    out_ref[...] = jnp.sum(jnp.abs(pred - rep_ref[...].astype(jnp.float32)),
                           axis=-1, keepdims=True)


def tre_forward(rep, leaf_ids, embedding, w_left, w_right, tree=TREE, *,
                b_tile=128, param_dtype=None):
    """rep: (B, D) f32; leaf_ids: (B, n_leaves) int32.  Returns (B,) f32 distances.

    param_dtype=jnp.bfloat16 casts embedding / composition weights (matmul
    operands) to bf16 for the v6e/v7x fast path; accumulation and all
    elementwise math remain f32.
    """
    B, d = rep.shape
    v = embedding.shape[0]
    n_leaves = leaf_ids.shape[1]
    assert B % b_tile == 0 and b_tile % 8 == 0

    if param_dtype is not None:
        embedding = embedding.astype(param_dtype)
        w_left = w_left.astype(param_dtype)
        w_right = w_right.astype(param_dtype)
    w = jnp.concatenate([w_left, w_right], axis=0)          # (2D, D) fused

    leaf_slots, levels, root_id = plan_tree(tree)
    kern = functools.partial(tre_kernel, leaf_slots=leaf_slots,
                             levels=levels, root_id=root_id)

    out = pl.pallas_call(
        kern,
        out_shape=jax.ShapeDtypeStruct((B, 1), jnp.float32),
        grid=(B // b_tile,),
        in_specs=[
            pl.BlockSpec((b_tile, n_leaves), lambda b: (b, 0)),   # leaf ids (batch-tiled, VMEM)
            pl.BlockSpec((v, d), lambda b: (0, 0)),               # embedding table (resident)
            pl.BlockSpec((2 * d, d), lambda b: (0, 0)),           # fused comp weights (resident)
            pl.BlockSpec((b_tile, d), lambda b: (b, 0)),          # reps (batch-tiled)
        ],
        out_specs=pl.BlockSpec((b_tile, 1), lambda b: (b, 0)),
        compiler_params=pltpu.CompilerParams(
            dimension_semantics=("parallel",)),                   # v7x: 2 TCs share the batch
    )(leaf_ids, embedding, w, rep)
    return out[:, 0]


def tre_reference(rep, leaf_ids, embedding, w_left, w_right, tree=TREE):
    """Pure-JAX reference mirroring the PyTorch recursion (batched over B)."""
    hi = jax.lax.Precision.HIGHEST

    def comp(l, r):
        return jnp.tanh(jnp.dot(l, w_left, precision=hi)
                        + jnp.dot(r, w_right, precision=hi))

    def go(t):
        if isinstance(t, tuple):
            return comp(go(t[0]), go(t[1]))
        return embedding[leaf_ids[:, t]]

    return jnp.sum(jnp.abs(go(tree) - rep), axis=-1)


if __name__ == "__main__":
    key = jax.random.PRNGKey(0)
    k_emb, k_wl, k_wr, k_rep, k_ids = jax.random.split(key, 5)

    B = 256          # trees evaluated per pallas_call (2 batch tiles of 128)
    n_leaves = 4

    # Deterministic parameter init (zero_init=False branch of TREModel.__init__)
    embedding = jax.random.normal(k_emb, (V, D), dtype=jnp.float32)
    w_left = jax.random.normal(k_wl, (D, D), dtype=jnp.float32) * (1.0 / jnp.sqrt(D))
    w_right = jax.random.normal(k_wr, (D, D), dtype=jnp.float32) * (1.0 / jnp.sqrt(D))

    # Inputs: one representation + one set of leaf token ids per tree.
    rep = jax.random.normal(k_rep, (B, D), dtype=jnp.float32)
    leaf_ids = jax.random.randint(k_ids, (B, n_leaves), 0, V, dtype=jnp.int32)

    ref = tre_reference(rep, leaf_ids, embedding, w_left, w_right)

    # f32 operands (works on all TPU generations).
    dist = jax.block_until_ready(
        tre_forward(rep, leaf_ids, embedding, w_left, w_right))
    assert dist.shape == (B,)
    assert jnp.allclose(dist, ref, rtol=2e-2, atol=1e-2), (dist[:4], ref[:4])

    # bf16 matmul operands (v6e/v7x fast path; f32 accumulation / tanh / L1).
    dist_bf16 = jax.block_until_ready(
        tre_forward(rep, leaf_ids, embedding, w_left, w_right,
                    param_dtype=jnp.bfloat16))
    assert jnp.allclose(dist_bf16, ref, rtol=5e-2, atol=1.0), (dist_bf16[:4], ref[:4])

    print("KERNEL_OK")
</pallas_src>

<mosaic_0001>
module attributes {stable_mosaic.version = 11 : i64} {
  func.func @tre_kernel(%arg0: i32, %arg1: memref<128x4xi32, #tpu.memory_space<vmem>>, %arg2: memref<16x128xf32, #tpu.memory_space<vmem>>, %arg3: memref<256x128xf32, #tpu.memory_space<vmem>>, %arg4: memref<128x128xf32, #tpu.memory_space<vmem>>, %arg5: memref<128x1xf32, #tpu.memory_space<vmem>>) attributes {dimension_semantics = [#tpu.dimension_semantics<parallel>], iteration_bounds = array<i64: 2>, scalar_prefetch = 0 : i64, scratch_operands = 0 : i64, tpu.core_type = #tpu.core_type<tc>, window_params = [{transform_indices = @transform_0, window_bounds = array<i64: 128, 4>}, {pipeline_mode = #tpu.pipeline_mode<synchronous>, transform_indices = @transform_1, window_bounds = array<i64: 16, 128>}, {pipeline_mode = #tpu.pipeline_mode<synchronous>, transform_indices = @transform_2, window_bounds = array<i64: 256, 128>}, {transform_indices = @transform_3, window_bounds = array<i64: 128, 128>}, {transform_indices = @transform_4, window_bounds = array<i64: 128, 1>}]} {
    %c0 = arith.constant 0 : index
    %c0_0 = arith.constant 0 : index
    %0 = vector.load %arg2[%c0, %c0_0] : memref<16x128xf32, #tpu.memory_space<vmem>>, vector<16x128xf32>
    %c0_1 = arith.constant 0 : index
    %c0_2 = arith.constant 0 : index
    %1 = vector.load %arg1[%c0_1, %c0_2] : memref<128x4xi32, #tpu.memory_space<vmem>>, vector<128x4xi32>
    %2 = tpu.iota {dimensions = array<i32: 1>} : vector<128x16xi32>
    %3 = vector.extract_strided_slice %1 {offsets = [0, 0], sizes = [128, 1], strides = [1, 1]} : vector<128x4xi32> to vector<128x1xi32>
    %4 = vector.broadcast %3 : vector<128x1xi32> to vector<128x16xi32>
    %5 = arith.cmpi eq, %4, %2 : vector<128x16xi32>
    %cst = arith.constant 1.000000e+00 : f32
    %cst_3 = arith.constant 0.000000e+00 : f32
    %6 = vector.broadcast %cst : f32 to vector<128x16xf32>
    %7 = vector.broadcast %cst_3 : f32 to vector<128x16xf32>
    %8 = arith.select %5, %6, %7 : vector<128x16xi1>, vector<128x16xf32>
    %cst_4 = arith.constant dense<0.000000e+00> : vector<128x128xf32>
    %9 = tpu.matmul %8, %0, %cst_4 {dimension_numbers = #tpu.dot_dimension_numbers<[1], [0], [0], [1], [0, 0, 1, 1], [], []>} : vector<128x16xf32>, vector<16x128xf32>, vector<128x128xf32> -> vector<128x128xf32>
    %10 = vector.extract_strided_slice %1 {offsets = [0, 1], sizes = [128, 1], strides = [1, 1]} : vector<128x4xi32> to vector<128x1xi32>
    %11 = vector.broadcast %10 : vector<128x1xi32> to vector<128x16xi32>
    %12 = arith.cmpi eq, %11, %2 : vector<128x16xi32>
    %cst_5 = arith.constant 1.000000e+00 : f32
    %cst_6 = arith.constant 0.000000e+00 : f32
    %13 = vector.broadcast %cst_5 : f32 to vector<128x16xf32>
    %14 = vector.broadcast %cst_6 : f32 to vector<128x16xf32>
    %15 = arith.select %12, %13, %14 : vector<128x16xi1>, vector<128x16xf32>
    %cst_7 = arith.constant dense<0.000000e+00> : vector<128x128xf32>
    %16 = tpu.matmul %15, %0, %cst_7 {dimension_numbers = #tpu.dot_dimension_numbers<[1], [0], [0], [1], [0, 0, 1, 1], [], []>} : vector<128x16xf32>, vector<16x128xf32>, vector<128x128xf32> -> vector<128x128xf32>
    %17 = vector.extract_strided_slice %1 {offsets = [0, 2], sizes = [128, 1], strides = [1, 1]} : vector<128x4xi32> to vector<128x1xi32>
    %18 = vector.broadcast %17 : vector<128x1xi32> to vector<128x16xi32>
    %19 = arith.cmpi eq, %18, %2 : vector<128x16xi32>
    %cst_8 = arith.constant 1.000000e+00 : f32
    %cst_9 = arith.constant 0.000000e+00 : f32
    %20 = vector.broadcast %cst_8 : f32 to vector<128x16xf32>
    %21 = vector.broadcast %cst_9 : f32 to vector<128x16xf32>
    %22 = arith.select %19, %20, %21 : vector<128x16xi1>, vector<128x16xf32>
    %cst_10 = arith.constant dense<0.000000e+00> : vector<128x128xf32>
    %23 = tpu.matmul %22, %0, %cst_10 {dimension_numbers = #tpu.dot_dimension_numbers<[1], [0], [0], [1], [0, 0, 1, 1], [], []>} : vector<128x16xf32>, vector<16x128xf32>, vector<128x128xf32> -> vector<128x128xf32>
    %24 = vector.extract_strided_slice %1 {offsets = [0, 3], sizes = [128, 1], strides = [1, 1]} : vector<128x4xi32> to vector<128x1xi32>
    %25 = vector.broadcast %24 : vector<128x1xi32> to vector<128x16xi32>
    %26 = arith.cmpi eq, %25, %2 : vector<128x16xi32>
    %cst_11 = arith.constant 1.000000e+00 : f32
    %cst_12 = arith.constant 0.000000e+00 : f32
    %27 = vector.broadcast %cst_11 : f32 to vector<128x16xf32>
    %28 = vector.broadcast %cst_12 : f32 to vector<128x16xf32>
    %29 = arith.select %26, %27, %28 : vector<128x16xi1>, vector<128x16xf32>
    %cst_13 = arith.constant dense<0.000000e+00> : vector<128x128xf32>
    %30 = tpu.matmul %29, %0, %cst_13 {dimension_numbers = #tpu.dot_dimension_numbers<[1], [0], [0], [1], [0, 0, 1, 1], [], []>} : vector<128x16xf32>, vector<16x128xf32>, vector<128x128xf32> -> vector<128x128xf32>
    %c0_14 = arith.constant 0 : index
    %c0_15 = arith.constant 0 : index
    %31 = vector.load %arg3[%c0_14, %c0_15] : memref<256x128xf32, #tpu.memory_space<vmem>>, vector<256x128xf32>
    %32 = tpu.concatenate %9, %16 in 1 : vector<128x128xf32>, vector<128x128xf32> -> vector<128x256xf32>
    %33 = tpu.concatenate %23, %30 in 1 : vector<128x128xf32>, vector<128x128xf32> -> vector<128x256xf32>
    %34 = tpu.concatenate %32, %33 in 0 : vector<128x256xf32>, vector<128x256xf32> -> vector<256x256xf32>
    %cst_16 = arith.constant dense<0.000000e+00> : vector<256x128xf32>
    %35 = tpu.matmul %34, %31, %cst_16 {dimension_numbers = #tpu.dot_dimension_numbers<[1], [0], [0], [1], [0, 0, 1, 1], [], []>} : vector<256x256xf32>, vector<256x128xf32>, vector<256x128xf32> -> vector<256x128xf32>
    %36 = math.tanh %35 : vector<256x128xf32>
    %37 = vector.extract_strided_slice %36 {offsets = [0, 0], sizes = [128, 128], strides = [1, 1]} : vector<256x128xf32> to vector<128x128xf32>
    %38 = vector.extract_strided_slice %36 {offsets = [128, 0], sizes = [128, 128], strides = [1, 1]} : vector<256x128xf32> to vector<128x128xf32>
    %39 = tpu.concatenate %37, %38 in 1 : vector<128x128xf32>, vector<128x128xf32> -> vector<128x256xf32>
    %cst_17 = arith.constant dense<0.000000e+00> : vector<128x128xf32>
    %40 = tpu.matmul %39, %31, %cst_17 {dimension_numbers = #tpu.dot_dimension_numbers<[1], [0], [0], [1], [0, 0, 1, 1], [], []>} : vector<128x256xf32>, vector<256x128xf32>, vector<128x128xf32> -> vector<128x128xf32>
    %41 = math.tanh %40 : vector<128x128xf32>
    %c0_18 = arith.constant 0 : index
    %c0_19 = arith.constant 0 : index
    %42 = vector.load %arg4[%c0_18, %c0_19] : memref<128x128xf32, #tpu.memory_space<vmem>>, vector<128x128xf32>
    %43 = arith.subf %41, %42 : vector<128x128xf32>
    %44 = math.absf %43 : vector<128x128xf32>
    %cst_20 = arith.constant dense<0.000000e+00> : vector<128xf32>
    %45 = vector.multi_reduction <add>, %44, %cst_20 [1] : vector<128x128xf32> to vector<128xf32>
    %46 = vector.shape_cast %45 : vector<128xf32> to vector<128x1xf32>
    %c0_21 = arith.constant 0 : index
    %c0_22 = arith.constant 0 : index
    %47 = vector.load %arg5[%c0_21, %c0_22] : memref<128x1xf32, #tpu.memory_space<vmem>>, vector<128x1xf32>
    tpu.vector_store %arg5[%c0_21, %c0_22], %46 {strides = array<i32>} : memref<128x1xf32, #tpu.memory_space<vmem>>, vector<128x1xf32>,
    return
  }
  func.func @transform_0(%arg0: i32) -> (i32, i32) {
    %c0_i32 = arith.constant 0 : i32
    %c0_i32_0 = arith.constant 0 : i32
    return %arg0, %c0_i32 : i32, i32
  }
  func.func @transform_1(%arg0: i32) -> (i32, i32) {
    %c0_i32 = arith.constant 0 : i32
    %c0_i32_0 = arith.constant 0 : i32
    %c0_i32_1 = arith.constant 0 : i32
    return %c0_i32, %c0_i32_0 : i32, i32
  }
  func.func @transform_2(%arg0: i32) -> (i32, i32) {
    %c0_i32 = arith.constant 0 : i32
    %c0_i32_0 = arith.constant 0 : i32
    %c0_i32_1 = arith.constant 0 : i32
    return %c0_i32, %c0_i32_0 : i32, i32
  }
  func.func @transform_3(%arg0: i32) -> (i32, i32) {
    %c0_i32 = arith.constant 0 : i32
    %c0_i32_0 = arith.constant 0 : i32
    return %arg0, %c0_i32 : i32, i32
  }
  func.func @transform_4(%arg0: i32) -> (i32, i32) {
    %c0_i32 = arith.constant 0 : i32
    %c0_i32_0 = arith.constant 0 : i32
    return %arg0, %c0_i32 : i32, i32
  }
}

</mosaic_0001>

<llo_original>
// kernel: tpu_custom_call.1
$region0: #{tpu_custom_call.1}
  #allocation0 [shape = 'u32[]', space=smem, size = 0x4, offset = 0x4, fixed_abs, tag = 'smem constant byte address 0x4 - core index']
  #allocation1 [shape = 'u32[144,128]{1,0:T(1,128)}', space=vmem, size = 0x12000, scoped, tag = 'internal scratch']
  %s0 = inlined_call_operand.vmem [shape: s32[256,4], index: 0, kind: input, shape index: {}]
  %s1 = inlined_call_operand.hbm [shape: f32[16,128], index: 1, kind: input, shape index: {}]
  %s2 = inlined_call_operand.vmem [shape: f32[256,128], index: 2, kind: input, shape index: {}]
  %s3 = inlined_call_operand.hbm [shape: f32[256,128], index: 3, kind: input, shape index: {}]
  %s4 = inlined_call_operand.vmem [shape: f32[256,1], index: 4, kind: output, shape index: {}]
  %s5 = sld [smem:[#allocation0]]
  $region57: #{tpu_custom_call.1} parent=0
    _
  %s7 = ssub.s32 1, %s5
  %s8 = scalar_select 0, %s7, %s5
  $region1: #{tpu_custom_call.1} parent=0
    #allocation2 [shape = 'u8[8192]{0}', space=vmem, size = 0x2000, scoped, tag = 'input window, operand 1, single buffered']
    #allocation3 [shape = 's32[2]{0}', space=sflag, size = 0x8, scoped, tag = 'scoped memory for tpu_custom_call.1']
    #allocation4 [shape = 'u8[131072]{0}', space=vmem, size = 0x20000, scoped, tag = 'input window, operand 3']
    #allocation5 [shape = 's32[2]{0}', space=sflag, size = 0x8, scoped, tag = 'scoped memory for tpu_custom_call.1']
    %9 = vsyncpa [#allocation3], 0
    %10 = vsyncpa [#allocation5], 0
    %s11 = scalar_lea.sflag [#allocation5], 1
    %12 = vsyncpa %s11, 0
    loop: start=0, step=1, limit=4
    $region2: #{tpu_custom_call.1} parent=1 // loop_pre_header
      _
    $region3: #{tpu_custom_call.1} parent=1 // loop_header
      %s14 = sphi 0, %s18
      %p15 = scmp.ge.s32.totalorder %s14, 4
      %s24 = sphi 0, %s26
      %s27 = sphi 0, %s24
      %s28 = sphi 0, %s27
      %s44 = sphi 0, %s28
      %s48 = sphi 0, %s48
      %s50 = sphi 0, %s48
      %s51 = sphi 0, %s50
      %s65 = sphi 0, %s51
      %s69 = sphi 0, %s69
      %s71 = sphi 0, %s69
      %s72 = sphi 0, %s71
      %s86 = sphi 0, %s72
      %s92 = sphi 0, %s94
      %s95 = sphi 0, %s92
      %s96 = sphi 0, %s95
      %s112 = sphi 0, %s96
      %s118 = sphi 0, %s120
      %s121 = sphi 0, %s118
      %s122 = sphi 0, %s121
      %s138 = sphi 0, %s122
    $region4: #{tpu_custom_call.1} parent=1 // loop_header_branch
      %17 = sbr.rel (%p15) target = $region8
    $region5: #{tpu_custom_call.1} parent=1 // loop_body
      %s19 = ssub.s32 %s14, 1
      %s20 = ssub.s32 %s14, 2
      %s21 = sadd.s32 %s14, 1
      %s22 = ssub.s32 %s14, %s21
      %p23 = scmp.eq.s32.totalorder %s22, 0
      %s25 = sadd.s32 %s24, 1
      %s26 = scalar_select %p23, %s24, %s25
      %p29 = pneg %p23
      %p30 = scmp.eq.s32.totalorder %s14, 1
      %p31 = por %p29, %p30
      %p32 = scmp.ne.s32.totalorder %s24, %s27
      %p33 = scmp.eq.s32.totalorder %s14, 0
      %p34 = por %p32, %p33
      %p35 = scmp.ne.s32.totalorder %s24, %s27
      %p36 = scmp.eq.s32.totalorder %s19, 1
      %p37 = por %p35, %p36
      %p38 = scmp.ne.s32.totalorder %s27, %s28
      %p39 = scmp.eq.s32.totalorder %s19, 0
      %p40 = por %p38, %p39
      %p41 = scmp.ne.s32.totalorder %s27, %s28
      %p42 = scmp.eq.s32.totalorder %s20, 1
      %p43 = por %p41, %p42
      %p45 = scmp.ne.s32.totalorder %s28, %s44
      %p46 = scmp.eq.s32.totalorder %s20, 0
      %p47 = por %p45, %p46
      %s49 = sadd.s32 %s48, 1
      %p52 = scmp.eq.s32.totalorder %s14, 1
      %p53 = scmp.ne.s32.totalorder %s48, %s50
      %p54 = scmp.eq.s32.totalorder %s14, 0
      %p55 = por %p53, %p54
      %p56 = scmp.ne.s32.totalorder %s48, %s50
      %p57 = scmp.eq.s32.totalorder %s19, 1
      %p58 = por %p56, %p57
      %p59 = scmp.ne.s32.totalorder %s50, %s51
      %p60 = scmp.eq.s32.totalorder %s19, 0
      %p61 = por %p59, %p60
      %p62 = scmp.ne.s32.totalorder %s50, %s51
      %p63 = scmp.eq.s32.totalorder %s20, 1
      %p64 = por %p62, %p63
      %p66 = scmp.ne.s32.totalorder %s51, %s65
      %p67 = scmp.eq.s32.totalorder %s20, 0
      %p68 = por %p66, %p67
      %s70 = sadd.s32 %s69, 1
      %p73 = scmp.eq.s32.totalorder %s14, 1
      %p74 = scmp.ne.s32.totalorder %s69, %s71
      %p75 = scmp.eq.s32.totalorder %s14, 0
      %p76 = por %p74, %p75
      %p77 = scmp.ne.s32.totalorder %s69, %s71
      %p78 = scmp.eq.s32.totalorder %s19, 1
      %p79 = por %p77, %p78
      %p80 = scmp.ne.s32.totalorder %s71, %s72
      %p81 = scmp.eq.s32.totalorder %s19, 0
      %p82 = por %p80, %p81
      %p83 = scmp.ne.s32.totalorder %s71, %s72
      %p84 = scmp.eq.s32.totalorder %s20, 1
      %p85 = por %p83, %p84
      %p87 = scmp.ne.s32.totalorder %s72, %s86
      %p88 = scmp.eq.s32.totalorder %s20, 0
      %p89 = por %p87, %p88
      %s90 = ssub.s32 %s14, %s21
      %p91 = scmp.eq.s32.totalorder %s90, 0
      %s93 = sadd.s32 %s92, 1
      %s94 = scalar_select %p91, %s92, %s93
      %p97 = pneg %p91
      %p98 = scmp.eq.s32.totalorder %s14, 1
      %p99 = por %p97, %p98
      %p100 = scmp.ne.s32.totalorder %s92, %s95
      %p101 = scmp.eq.s32.totalorder %s14, 0
      %p102 = por %p100, %p101
      %p103 = scmp.ne.s32.totalorder %s92, %s95
      %p104 = scmp.eq.s32.totalorder %s19, 1
      %p105 = por %p103, %p104
      %p106 = scmp.ne.s32.totalorder %s95, %s96
      %p107 = scmp.eq.s32.totalorder %s19, 0
      %p108 = por %p106, %p107
      %p109 = scmp.ne.s32.totalorder %s95, %s96
      %p110 = scmp.eq.s32.totalorder %s20, 1
      %p111 = por %p109, %p110
      %p113 = scmp.ne.s32.totalorder %s96, %s112
      %p114 = scmp.eq.s32.totalorder %s20, 0
      %p115 = por %p113, %p114
      %s116 = ssub.s32 %s14, %s21
      %p117 = scmp.eq.s32.totalorder %s116, 0
      %s119 = sadd.s32 %s118, 1
      %s120 = scalar_select %p117, %s118, %s119
      %p123 = pneg %p117
      %p124 = scmp.eq.s32.totalorder %s14, 1
      %p125 = por %p123, %p124
      %p126 = scmp.ne.s32.totalorder %s118, %s121
      %p127 = scmp.eq.s32.totalorder %s14, 0
      %p128 = por %p126, %p127
      %p129 = scmp.ne.s32.totalorder %s118, %s121
      %p130 = scmp.eq.s32.totalorder %s19, 1
      %p131 = por %p129, %p130
      %p132 = scmp.ne.s32.totalorder %s121, %s122
      %p133 = scmp.eq.s32.totalorder %s19, 0
      %p134 = por %p132, %p133
      %p135 = scmp.ne.s32.totalorder %s121, %s122
      %p136 = scmp.eq.s32.totalorder %s20, 1
      %p137 = por %p135, %p136
      %p139 = scmp.ne.s32.totalorder %s122, %s138
      %p140 = scmp.eq.s32.totalorder %s20, 0
      %p141 = por %p139, %p140
      %p142 = scmp.le.s32.totalorder 1, %s14
      %p143 = scmp.lt.s32.totalorder %s14, 3
      %p144 = pnand %p142, %p143
      %p145 = pneg %p144
      // Predicated region
      $region9: #{tpu_custom_call.1} parent=5 // pred_check
        _
      $region10: #{tpu_custom_call.1} parent=5 // pred_check_branch
        %147 = sbr.rel (%p144) target = $region12
      $region11: #{tpu_custom_call.1} parent=5 // pred_region
        %s148 = ssub.s32 %s14, 1
        // Predicated region
        $region13: #{tpu_custom_call.1} parent=11 // pred_check
          %p149 = pneg %p61
        $region14: #{tpu_custom_call.1} parent=11 // pred_check_branch
          %151 = sbr.rel (%p149) target = $region16
        $region15: #{tpu_custom_call.1} parent=11 // pred_region
          %s153 = ssub.s32 256, 256
          %154 = vsyncadd [#allocation3], %s153
          %s155 = sshll.u32 [#allocation2], 4
          %s156 = int_to_ptr.vmem [resolvable:$true] %s155
          %161 = dma.hbm_to_vmem [thread:$0]  %s1, 256, %s156, [#allocation3], 128, 128, 8
        $region16: #{tpu_custom_call.1} parent=11 // pred_fallthru
          _
        // Predicated region
        $region17: #{tpu_custom_call.1} parent=11 // pred_check
          %p162 = pneg %p82
        $region18: #{tpu_custom_call.1} parent=11 // pred_check_branch
          %164 = sbr.rel (%p162) target = $region20
        $region19: #{tpu_custom_call.1} parent=11 // pred_region
          _
        $region20: #{tpu_custom_call.1} parent=11 // pred_fallthru
          _
      $region12: #{tpu_custom_call.1} parent=5 // pred_fallthru
        _
      %p165 = scmp.lt.s32.totalorder %s14, 2
      // Predicated region
      $region21: #{tpu_custom_call.1} parent=5 // pred_check
        %p166 = pneg %p165
      $region22: #{tpu_custom_call.1} parent=5 // pred_check_branch
        %168 = sbr.rel (%p166) target = $region24
      $region23: #{tpu_custom_call.1} parent=5 // pred_region
        // Predicated region
        $region25: #{tpu_custom_call.1} parent=23 // pred_check
          %p169 = pneg %p34
        $region26: #{tpu_custom_call.1} parent=23 // pred_check_branch
          %171 = sbr.rel (%p169) target = $region28
        $region27: #{tpu_custom_call.1} parent=23 // pred_region
          %s172 = smul.u32 16, %s14
          %p173 = scmp.lt.s32.totalorder %s172, 31
          %s174 = scalar_select %p173, %s172, 31
          %s175 = smul.addr %s174, 8
          %s176 = scalar_lea.vmem %s0, %s175
          %s177 = smul.u32 16, %s14
        $region28: #{tpu_custom_call.1} parent=23 // pred_fallthru
          _
        // Predicated region
        $region29: #{tpu_custom_call.1} parent=23 // pred_check
          %p178 = pneg %p102
        $region30: #{tpu_custom_call.1} parent=23 // pred_check_branch
          %180 = sbr.rel (%p178) target = $region32
        $region31: #{tpu_custom_call.1} parent=23 // pred_region
          %s181 = sand.u32 %s92, 1
          %s182 = scalar_lea.sflag [#allocation5], %s181
          %s183 = sand.u32 %s92, 1
          %s184 = smul.addr %s183, 128
          %s185 = scalar_lea.vmem [#allocation4], %s184
          %s186 = smul.u32 16, %s14
          %s188 = ssub.s32 2048, 2048
          %189 = vsyncadd %s182, %s188
          %s190 = smul.addr %s186, 128
          %s191 = scalar_lea.hbm %s3, %s190
          %s192 = sshll.u32 %s185, 4
          %s193 = int_to_ptr.vmem [resolvable:$true] %s192
          %198 = dma.hbm_to_vmem [thread:$0]  %s191, 2048, %s193, %s182, 128, 128, 8
        $region32: #{tpu_custom_call.1} parent=23 // pred_fallthru
          _
      $region24: #{tpu_custom_call.1} parent=5 // pred_fallthru
        _
      %p199 = scmp.le.s32.totalorder 1, %s14
      %p200 = scmp.lt.s32.totalorder %s14, 3
      %p201 = pnand %p199, %p200
      %p202 = pneg %p201
      // Predicated region
      $region33: #{tpu_custom_call.1} parent=5 // pred_check
        _
      $region34: #{tpu_custom_call.1} parent=5 // pred_check_branch
        %204 = sbr.rel (%p201) target = $region36
      $region35: #{tpu_custom_call.1} parent=5 // pred_region
        %s205 = ssub.s32 %s14, 1
        // Predicated region
        $region37: #{tpu_custom_call.1} parent=35 // pred_check
          %p206 = pneg %p61
        $region38: #{tpu_custom_call.1} parent=35 // pred_check_branch
          %208 = sbr.rel (%p206) target = $region40
        $region39: #{tpu_custom_call.1} parent=35 // pred_region
          %209 = dma.done [#allocation3], 256
        $region40: #{tpu_custom_call.1} parent=35 // pred_fallthru
          _
        %s210 = sand.u32 %s95, 1
        %s211 = scalar_lea.sflag [#allocation5], %s210
        %s212 = sand.u32 %s95, 1
        %s213 = smul.addr %s212, 128
        %s214 = scalar_lea.vmem [#allocation4], %s213
        // Predicated region
        $region41: #{tpu_custom_call.1} parent=35 // pred_check
          %p215 = pneg %p108
        $region42: #{tpu_custom_call.1} parent=35 // pred_check_branch
          %217 = sbr.rel (%p215) target = $region44
        $region43: #{tpu_custom_call.1} parent=35 // pred_region
          %218 = dma.done %s211, 2048
        $region44: #{tpu_custom_call.1} parent=35 // pred_fallthru
          _
        %s219 = smul.u32 16, %s19
        %p220 = scmp.lt.s32.totalorder %s219, 31
        %s221 = scalar_select %p220, %s219, 31
        %s222 = smul.addr %s221, 8
        %s223 = scalar_lea.vmem %s0, %s222
        %p224 = pneg %p40
        %p225 = pneg %p37
        %p226 = pneg %p61
        %p227 = pneg %p58
        %p228 = pneg %p82
        %p229 = pneg %p79
        %s230 = sand.u32 %s95, 1
        %s231 = scalar_lea.sflag [#allocation5], %s230
        %s232 = sand.u32 %s95, 1
        %s233 = smul.addr %s232, 128
        %s234 = scalar_lea.vmem [#allocation4], %s233
        %p235 = pneg %p108
        %p236 = pneg %p105
        %p237 = pneg %p134
        %p238 = pneg %p131
        %s239 = smul.u32 16, %s19
        %p240 = scmp.lt.s32.totalorder %s239, 31
        %s241 = scalar_select %p240, %s239, 31
        %s242 = smul.addr %s241, 8
        %s243 = scalar_lea.vmem %s4, %s242
        %s244 = smul.u32 16, %s19
        %p245 = scmp.lt.s32.totalorder %s244, 31
        %s246 = scalar_select %p245, %s244, 31
        %s247 = smul.addr %s246, 8
        %s248 = scalar_lea.vmem %s0, %s247
        %s249 = smul.u32 16, %s19
        %s250 = smul.u32 16, %s19
        %s251 = smul.u32 16, %s19
        %p252 = scmp.lt.s32.totalorder %s251, 31
        %s253 = scalar_select %p252, %s251, 31
        %s254 = smul.addr %s253, 8
        %s255 = scalar_lea.vmem %s4, %s254
        %s256 = smul.u32 16, %s19
        %v257 = vld [vmem:[#allocation2] sm:$0xff]
        %v258 = vld [vmem:[#allocation2 + $0x8] sm:$0xff]
        %v259 = vld [vmem:[%s248] sm:$0xff]
        %v260 = vld [vmem:[%s248 + $0x8] sm:$0xff]
        %v261 = vld [vmem:[%s248 + $0x10] sm:$0xff]
        %v262 = vld [vmem:[%s248 + $0x18] sm:$0xff]
        %v263 = vld [vmem:[%s248 + $0x20] sm:$0xff]
        %v264 = vld [vmem:[%s248 + $0x28] sm:$0xff]
        %v265 = vld [vmem:[%s248 + $0x30] sm:$0xff]
        %v266 = vld [vmem:[%s248 + $0x38] sm:$0xff]
        %v267 = vld [vmem:[%s248 + $0x40] sm:$0xff]
        %v268 = vld [vmem:[%s248 + $0x48] sm:$0xff]
        %v269 = vld [vmem:[%s248 + $0x50] sm:$0xff]
        %v270 = vld [vmem:[%s248 + $0x58] sm:$0xff]
        %v271 = vld [vmem:[%s248 + $0x60] sm:$0xff]
        %v272 = vld [vmem:[%s248 + $0x68] sm:$0xff]
        %v273 = vld [vmem:[%s248 + $0x70] sm:$0xff]
        %v274 = vld [vmem:[%s248 + $0x78] sm:$0xff]
        %v275 = vlaneseq
        %v276 = vand.u32 %v275, 127
        %277 = vset.pattern.permute.xlu0 0
        %278 = vperm.xlu0 %277, %v259
        %v279 = vpop.permute.xlu0 %278
        %280 = vset.pattern.permute.xlu0 0
        %281 = vperm.xlu0 %280, %v260
        %v282 = vpop.permute.xlu0 %281
        %283 = vset.pattern.permute.xlu0 0
        %284 = vperm.xlu0 %283, %v261
        %v285 = vpop.permute.xlu0 %284
        %286 = vset.pattern.permute.xlu0 0
        %287 = vperm.xlu0 %286, %v262
        %v288 = vpop.permute.xlu0 %287
        %289 = vset.pattern.permute.xlu0 0
        %290 = vperm.xlu0 %289, %v263
        %v291 = vpop.permute.xlu0 %290
        %292 = vset.pattern.permute.xlu0 0
        %293 = vperm.xlu0 %292, %v264
        %v294 = vpop.permute.xlu0 %293
        %295 = vset.pattern.permute.xlu0 0
        %296 = vperm.xlu0 %295, %v265
        %v297 = vpop.permute.xlu0 %296
        %298 = vset.pattern.permute.xlu0 0
        %299 = vperm.xlu0 %298, %v266
        %v300 = vpop.permute.xlu0 %299
        %301 = vset.pattern.permute.xlu0 0
        %302 = vperm.xlu0 %301, %v267
        %v303 = vpop.permute.xlu0 %302
        %304 = vset.pattern.permute.xlu0 0
        %305 = vperm.xlu0 %304, %v268
        %v306 = vpop.permute.xlu0 %305
        %307 = vset.pattern.permute.xlu0 0
        %308 = vperm.xlu0 %307, %v269
        %v309 = vpop.permute.xlu0 %308
        %310 = vset.pattern.permute.xlu0 0
        %311 = vperm.xlu0 %310, %v270
        %v312 = vpop.permute.xlu0 %311
        %313 = vset.pattern.permute.xlu0 0
        %314 = vperm.xlu0 %313, %v271
        %v315 = vpop.permute.xlu0 %314
        %316 = vset.pattern.permute.xlu0 0
        %317 = vperm.xlu0 %316, %v272
        %v318 = vpop.permute.xlu0 %317
        %319 = vset.pattern.permute.xlu0 0
        %320 = vperm.xlu0 %319, %v273
        %v321 = vpop.permute.xlu0 %320
        %322 = vset.pattern.permute.xlu0 0
        %323 = vperm.xlu0 %322, %v274
        %v324 = vpop.permute.xlu0 %323
        %vm325 = vcmp.eq.s32.totalorder %v279, %v276
        %vm326 = vcmp.eq.s32.totalorder %v282, %v276
        %vm327 = vcmp.eq.s32.totalorder %v285, %v276
        %vm328 = vcmp.eq.s32.totalorder %v288, %v276
        %vm329 = vcmp.eq.s32.totalorder %v291, %v276
        %vm330 = vcmp.eq.s32.totalorder %v294, %v276
        %vm331 = vcmp.eq.s32.totalorder %v297, %v276
        %vm332 = vcmp.eq.s32.totalorder %v300, %v276
        %vm333 = vcmp.eq.s32.totalorder %v303, %v276
        %vm334 = vcmp.eq.s32.totalorder %v306, %v276
        %vm335 = vcmp.eq.s32.totalorder %v309, %v276
        %vm336 = vcmp.eq.s32.totalorder %v312, %v276
        %vm337 = vcmp.eq.s32.totalorder %v315, %v276
        %vm338 = vcmp.eq.s32.totalorder %v318, %v276
        %vm339 = vcmp.eq.s32.totalorder %v321, %v276
        %vm340 = vcmp.eq.s32.totalorder %v324, %v276
        %v341 = vsel %vm325, 1.0, 0.0
        %v342 = vsel %vm326, 1.0, 0.0
        %v343 = vsel %vm327, 1.0, 0.0
        %v344 = vsel %vm328, 1.0, 0.0
        %v345 = vsel %vm329, 1.0, 0.0
        %v346 = vsel %vm330, 1.0, 0.0
        %v347 = vsel %vm331, 1.0, 0.0
        %v348 = vsel %vm332, 1.0, 0.0
        %v349 = vsel %vm333, 1.0, 0.0
        %v350 = vsel %vm334, 1.0, 0.0
        %v351 = vsel %vm335, 1.0, 0.0
        %v352 = vsel %vm336, 1.0, 0.0
        %v353 = vsel %vm337, 1.0, 0.0
        %v354 = vsel %vm338, 1.0, 0.0
        %v355 = vsel %vm339, 1.0, 0.0
        %v356 = vsel %vm340, 1.0, 0.0
        %vm357 = vcmask 130048
        %v359 = vsel %vm357, %v341, 0
        %v362 = vsel %vm357, %v342, 0
        %v365 = vsel %vm357, %v343, 0
        %v368 = vsel %vm357, %v344, 0
        %v371 = vsel %vm357, %v345, 0
        %v374 = vsel %vm357, %v346, 0
        %v377 = vsel %vm357, %v347, 0
        %v380 = vsel %vm357, %v348, 0
        %v383 = vsel %vm357, %v349, 0
        %v386 = vsel %vm357, %v350, 0
        %v389 = vsel %vm357, %v351, 0
        %v392 = vsel %vm357, %v352, 0
        %v395 = vsel %vm357, %v353, 0
        %v398 = vsel %vm357, %v354, 0
        %v401 = vsel %vm357, %v355, 0
        %v404 = vsel %vm357, %v356, 0
        %406 = vmatprep.subr.mxu0 0.0
        %407 = vmatpush1.msra.mxu0 0.0
        %408 = vmatprep.subr.mxu0 0.0
        %409 = vmatpush1.msra.mxu0 0.0
        %410 = vmatprep.subr.mxu0 0.0
        %411 = vmatpush1.msra.mxu0 0.0
        %412 = vmatprep.subr.mxu0 0.0
        %413 = vmatpush1.msra.mxu0 0.0
        %414 = vmatprep.subr.mxu0 0.0
        %415 = vmatpush1.msra.mxu0 0.0
        %416 = vmatprep.subr.mxu0 0.0
        %417 = vmatpush1.msra.mxu0 0.0
        %418 = vmatprep.subr.mxu0 0.0
        %419 = vmatpush1.msra.mxu0 0.0
        %420 = vmatprep.subr.mxu0 0.0
        %421 = vmatpush1.msra.mxu0 0.0
        %422 = vmatprep.subr.mxu0 0.0
        %423 = vmatpush1.msra.mxu0 0.0
        %424 = vmatprep.subr.mxu0 0.0
        %425 = vmatpush1.msra.mxu0 0.0
        %426 = vmatprep.subr.mxu0 0.0
        %427 = vmatpush1.msra.mxu0 0.0
        %428 = vmatprep.subr.mxu0 0.0
        %429 = vmatpush1.msra.mxu0 0.0
        %430 = vmatprep.subr.mxu0 0.0
        %431 = vmatpush1.msra.mxu0 0.0
        %432 = vmatprep.subr.mxu0 0.0
        %433 = vmatpush1.msra.mxu0 0.0
        %434 = vmatprep.subr.mxu0 0.0
        %435 = vmatpush1.msra.mxu0 %v258
        %436 = vmatprep.subr.mxu0 0.0
        %437 = vmatpush1.msra.mxu0 %v257
        %438 = vmatprep.subr.mxu0 0.0
        %439 = vmatpush2.msra.mxu0 0.0
        %440 = vmatprep.subr.mxu0 0.0
        %441 = vmatpush2.msra.mxu0 0.0
        %442 = vmatprep.subr.mxu0 0.0
        %443 = vmatpush2.msra.mxu0 0.0
        %444 = vmatprep.subr.mxu0 0.0
        %445 = vmatpush2.msra.mxu0 0.0
        %446 = vmatprep.subr.mxu0 0.0
        %447 = vmatpush2.msra.mxu0 0.0
        %448 = vmatprep.subr.mxu0 0.0
        %449 = vmatpush2.msra.mxu0 0.0
        %450 = vmatprep.subr.mxu0 0.0
        %451 = vmatpush2.msra.mxu0 0.0
        %452 = vmatprep.subr.mxu0 0.0
        %453 = vmatpush2.msra.mxu0 0.0
        %454 = vmatprep.subr.mxu0 0.0
        %455 = vmatpush2.msra.mxu0 0.0
        %456 = vmatprep.subr.mxu0 0.0
        %457 = vmatpush2.msra.mxu0 0.0
        %458 = vmatprep.subr.mxu0 0.0
        %459 = vmatpush2.msra.mxu0 0.0
        %460 = vmatprep.subr.mxu0 0.0
        %461 = vmatpush2.msra.mxu0 0.0
        %462 = vmatprep.subr.mxu0 0.0
        %463 = vmatpush2.msra.mxu0 0.0
        %464 = vmatprep.subr.mxu0 0.0
        %465 = vmatpush2.msra.mxu0 0.0
        %466 = vmatprep.subr.mxu0 0.0
        %467 = vmatpush2.msra.mxu0 0.0
        %468 = vmatprep.subr.mxu0 0.0
        %469 = vmatpush2.msra.mxu0 0.0
        %470 = vmatprep.mubr.f32.mxu0 0.0
        %471 = vmatmul.mubr.f32.gmra.mxu0 %v359
        %v472 = vpop.f32.mrf.mxu0
        %v473 = vadd.f32 0.0, %v472
        %v474 = vpop.f32.mrf.mxu0
        %475 = vmatprep.mubr.f32.mxu0 0.0
        %476 = vmatmul.mubr.f32.gmra.mxu0 %v362
        %v477 = vpop.f32.mrf.mxu0
        %v478 = vadd.f32 0.0, %v477
        %v479 = vpop.f32.mrf.mxu0
        %480 = vmatprep.mubr.f32.mxu0 0.0
        %481 = vmatmul.mubr.f32.gmra.mxu0 %v365
        %v482 = vpop.f32.mrf.mxu0
        %v483 = vadd.f32 0.0, %v482
        %v484 = vpop.f32.mrf.mxu0
        %485 = vmatprep.mubr.f32.mxu0 0.0
        %486 = vmatmul.mubr.f32.gmra.mxu0 %v368
        %v487 = vpop.f32.mrf.mxu0
        %v488 = vadd.f32 0.0, %v487
        %v489 = vpop.f32.mrf.mxu0
        %490 = vmatprep.mubr.f32.mxu0 0.0
        %491 = vmatmul.mubr.f32.gmra.mxu0 %v371
        %v492 = vpop.f32.mrf.mxu0
        %v493 = vadd.f32 0.0, %v492
        %v494 = vpop.f32.mrf.mxu0
        %495 = vmatprep.mubr.f32.mxu0 0.0
        %496 = vmatmul.mubr.f32.gmra.mxu0 %v374
        %v497 = vpop.f32.mrf.mxu0
        %v498 = vadd.f32 0.0, %v497
        %v499 = vpop.f32.mrf.mxu0
        %500 = vmatprep.mubr.f32.mxu0 0.0
        %501 = vmatmul.mubr.f32.gmra.mxu0 %v377
        %v502 = vpop.f32.mrf.mxu0
        %v503 = vadd.f32 0.0, %v502
        %v504 = vpop.f32.mrf.mxu0
        %505 = vmatprep.mubr.f32.mxu0 0.0
        %506 = vmatmul.mubr.f32.gmra.mxu0 %v380
        %v507 = vpop.f32.mrf.mxu0
        %v508 = vadd.f32 0.0, %v507
        %v509 = vpop.f32.mrf.mxu0
        %510 = vmatprep.mubr.f32.mxu0 0.0
        %511 = vmatmul.mubr.f32.gmra.mxu0 %v383
        %v512 = vpop.f32.mrf.mxu0
        %v513 = vadd.f32 0.0, %v512
        %v514 = vpop.f32.mrf.mxu0
        %515 = vmatprep.mubr.f32.mxu0 0.0
        %516 = vmatmul.mubr.f32.gmra.mxu0 %v386
        %v517 = vpop.f32.mrf.mxu0
        %v518 = vadd.f32 0.0, %v517
        %v519 = vpop.f32.mrf.mxu0
        %520 = vmatprep.mubr.f32.mxu0 0.0
        %521 = vmatmul.mubr.f32.gmra.mxu0 %v389
        %v522 = vpop.f32.mrf.mxu0
        %v523 = vadd.f32 0.0, %v522
        %v524 = vpop.f32.mrf.mxu0
        %525 = vmatprep.mubr.f32.mxu0 0.0
        %526 = vmatmul.mubr.f32.gmra.mxu0 %v392
        %v527 = vpop.f32.mrf.mxu0
        %v528 = vadd.f32 0.0, %v527
        %v529 = vpop.f32.mrf.mxu0
        %530 = vmatprep.mubr.f32.mxu0 0.0
        %531 = vmatmul.mubr.f32.gmra.mxu0 %v395
        %v532 = vpop.f32.mrf.mxu0
        %v533 = vadd.f32 0.0, %v532
        %v534 = vpop.f32.mrf.mxu0
        %535 = vmatprep.mubr.f32.mxu0 0.0
        %536 = vmatmul.mubr.f32.gmra.mxu0 %v398
        %v537 = vpop.f32.mrf.mxu0
        %v538 = vadd.f32 0.0, %v537
        %v539 = vpop.f32.mrf.mxu0
        %540 = vmatprep.mubr.f32.mxu0 0.0
        %541 = vmatmul.mubr.f32.gmra.mxu0 %v401
        %v542 = vpop.f32.mrf.mxu0
        %v543 = vadd.f32 0.0, %v542
        %v544 = vpop.f32.mrf.mxu0
        %545 = vmatprep.mubr.f32.mxu0 0.0
        %546 = vmatmul.mubr.f32.gmra.mxu0 %v404
        %v547 = vpop.f32.mrf.mxu0
        %v548 = vadd.f32 0.0, %v547
        %v549 = vpop.f32.mrf.mxu0
        %550 = vdwg.mxu0
        %551 = vset.pattern.permute.xlu0 1
        %552 = vperm.xlu0 %551, %v259
        %v553 = vpop.permute.xlu0 %552
        %554 = vset.pattern.permute.xlu0 1
        %555 = vperm.xlu0 %554, %v260
        %v556 = vpop.permute.xlu0 %555
        %557 = vset.pattern.permute.xlu0 1
        %558 = vperm.xlu0 %557, %v261
        %v559 = vpop.permute.xlu0 %558
        %560 = vset.pattern.permute.xlu0 1
        %561 = vperm.xlu0 %560, %v262
        %v562 = vpop.permute.xlu0 %561
        %563 = vset.pattern.permute.xlu0 1
        %564 = vperm.xlu0 %563, %v263
        %v565 = vpop.permute.xlu0 %564
        %566 = vset.pattern.permute.xlu0 1
        %567 = vperm.xlu0 %566, %v264
        %v568 = vpop.permute.xlu0 %567
        %569 = vset.pattern.permute.xlu0 1
        %570 = vperm.xlu0 %569, %v265
        %v571 = vpop.permute.xlu0 %570
        %572 = vset.pattern.permute.xlu0 1
        %573 = vperm.xlu0 %572, %v266
        %v574 = vpop.permute.xlu0 %573
        %575 = vset.pattern.permute.xlu0 1
        %576 = vperm.xlu0 %575, %v267
        %v577 = vpop.permute.xlu0 %576
        %578 = vset.pattern.permute.xlu0 1
        %579 = vperm.xlu0 %578, %v268
        %v580 = vpop.permute.xlu0 %579
        %581 = vset.pattern.permute.xlu0 1
        %582 = vperm.xlu0 %581, %v269
        %v583 = vpop.permute.xlu0 %582
        %584 = vset.pattern.permute.xlu0 1
        %585 = vperm.xlu0 %584, %v270
        %v586 = vpop.permute.xlu0 %585
        %587 = vset.pattern.permute.xlu0 1
        %588 = vperm.xlu0 %587, %v271
        %v589 = vpop.permute.xlu0 %588
        %590 = vset.pattern.permute.xlu0 1
        %591 = vperm.xlu0 %590, %v272
        %v592 = vpop.permute.xlu0 %591
        %593 = vset.pattern.permute.xlu0 1
        %594 = vperm.xlu0 %593, %v273
        %v595 = vpop.permute.xlu0 %594
        %596 = vset.pattern.permute.xlu0 1
        %597 = vperm.xlu0 %596, %v274
        %v598 = vpop.permute.xlu0 %597
        %vm599 = vcmp.eq.s32.totalorder %v553, %v276
        %vm600 = vcmp.eq.s32.totalorder %v556, %v276
        %vm601 = vcmp.eq.s32.totalorder %v559, %v276
        %vm602 = vcmp.eq.s32.totalorder %v562, %v276
        %vm603 = vcmp.eq.s32.totalorder %v565, %v276
        %vm604 = vcmp.eq.s32.totalorder %v568, %v276
        %vm605 = vcmp.eq.s32.totalorder %v571, %v276
        %vm606 = vcmp.eq.s32.totalorder %v574, %v276
        %vm607 = vcmp.eq.s32.totalorder %v577, %v276
        %vm608 = vcmp.eq.s32.totalorder %v580, %v276
        %vm609 = vcmp.eq.s32.totalorder %v583, %v276
        %vm610 = vcmp.eq.s32.totalorder %v586, %v276
        %vm611 = vcmp.eq.s32.totalorder %v589, %v276
        %vm612 = vcmp.eq.s32.totalorder %v592, %v276
        %vm613 = vcmp.eq.s32.totalorder %v595, %v276
        %vm614 = vcmp.eq.s32.totalorder %v598, %v276
        %v615 = vsel %vm599, 1.0, 0.0
        %v616 = vsel %vm600, 1.0, 0.0
        %v617 = vsel %vm601, 1.0, 0.0
        %v618 = vsel %vm602, 1.0, 0.0
        %v619 = vsel %vm603, 1.0, 0.0
        %v620 = vsel %vm604, 1.0, 0.0
        %v621 = vsel %vm605, 1.0, 0.0
        %v622 = vsel %vm606, 1.0, 0.0
        %v623 = vsel %vm607, 1.0, 0.0
        %v624 = vsel %vm608, 1.0, 0.0
        %v625 = vsel %vm609, 1.0, 0.0
        %v626 = vsel %vm610, 1.0, 0.0
        %v627 = vsel %vm611, 1.0, 0.0
        %v628 = vsel %vm612, 1.0, 0.0
        %v629 = vsel %vm613, 1.0, 0.0
        %v630 = vsel %vm614, 1.0, 0.0
        %v632 = vsel %vm357, %v615, 0
        %v635 = vsel %vm357, %v616, 0
        %v638 = vsel %vm357, %v617, 0
        %v641 = vsel %vm357, %v618, 0
        %v644 = vsel %vm357, %v619, 0
        %v647 = vsel %vm357, %v620, 0
        %v650 = vsel %vm357, %v621, 0
        %v653 = vsel %vm357, %v622, 0
        %v656 = vsel %vm357, %v623, 0
        %v659 = vsel %vm357, %v624, 0
        %v662 = vsel %vm357, %v625, 0
        %v665 = vsel %vm357, %v626, 0
        %v668 = vsel %vm357, %v627, 0
        %v671 = vsel %vm357, %v628, 0
        %v674 = vsel %vm357, %v629, 0
        %v677 = vsel %vm357, %v630, 0
        %679 = vmatprep.subr.mxu0 0.0
        %680 = vmatpush1.msra.mxu0 0.0
        %681 = vmatprep.subr.mxu0 0.0
        %682 = vmatpush1.msra.mxu0 0.0
        %683 = vmatprep.subr.mxu0 0.0
        %684 = vmatpush1.msra.mxu0 0.0
        %685 = vmatprep.subr.mxu0 0.0
        %686 = vmatpush1.msra.mxu0 0.0
        %687 = vmatprep.subr.mxu0 0.0
        %688 = vmatpush1.msra.mxu0 0.0
        %689 = vmatprep.subr.mxu0 0.0
        %690 = vmatpush1.msra.mxu0 0.0
        %691 = vmatprep.subr.mxu0 0.0
        %692 = vmatpush1.msra.mxu0 0.0
        %693 = vmatprep.subr.mxu0 0.0
        %694 = vmatpush1.msra.mxu0 0.0
        %695 = vmatprep.subr.mxu0 0.0
        %696 = vmatpush1.msra.mxu0 0.0
        %697 = vmatprep.subr.mxu0 0.0
        %698 = vmatpush1.msra.mxu0 0.0
        %699 = vmatprep.subr.mxu0 0.0
        %700 = vmatpush1.msra.mxu0 0.0
        %701 = vmatprep.subr.mxu0 0.0
        %702 = vmatpush1.msra.mxu0 0.0
        %703 = vmatprep.subr.mxu0 0.0
        %704 = vmatpush1.msra.mxu0 0.0
        %705 = vmatprep.subr.mxu0 0.0
        %706 = vmatpush1.msra.mxu0 0.0
        %707 = vmatprep.subr.mxu0 0.0
        %708 = vmatpush1.msra.mxu0 %v258
        %709 = vmatprep.subr.mxu0 0.0
        %710 = vmatpush1.msra.mxu0 %v257
        %711 = vmatprep.subr.mxu0 0.0
        %712 = vmatpush2.msra.mxu0 0.0
        %713 = vmatprep.subr.mxu0 0.0
        %714 = vmatpush2.msra.mxu0 0.0
        %715 = vmatprep.subr.mxu0 0.0
        %716 = vmatpush2.msra.mxu0 0.0
        %717 = vmatprep.subr.mxu0 0.0
        %718 = vmatpush2.msra.mxu0 0.0
        %719 = vmatprep.subr.mxu0 0.0
        %720 = vmatpush2.msra.mxu0 0.0
        %721 = vmatprep.subr.mxu0 0.0
        %722 = vmatpush2.msra.mxu0 0.0
        %723 = vmatprep.subr.mxu0 0.0
        %724 = vmatpush2.msra.mxu0 0.0
        %725 = vmatprep.subr.mxu0 0.0
        %726 = vmatpush2.msra.mxu0 0.0
        %727 = vmatprep.subr.mxu0 0.0
        %728 = vmatpush2.msra.mxu0 0.0
        %729 = vmatprep.subr.mxu0 0.0
        %730 = vmatpush2.msra.mxu0 0.0
        %731 = vmatprep.subr.mxu0 0.0
        %732 = vmatpush2.msra.mxu0 0.0
        %733 = vmatprep.subr.mxu0 0.0
        %734 = vmatpush2.msra.mxu0 0.0
        %735 = vmatprep.subr.mxu0 0.0
        %736 = vmatpush2.msra.mxu0 0.0
        %737 = vmatprep.subr.mxu0 0.0
        %738 = vmatpush2.msra.mxu0 0.0
        %739 = vmatprep.subr.mxu0 0.0
        %740 = vmatpush2.msra.mxu0 0.0
        %741 = vmatprep.subr.mxu0 0.0
        %742 = vmatpush2.msra.mxu0 0.0
        %743 = vmatprep.mubr.f32.mxu0 0.0
        %744 = vmatmul.mubr.f32.gmra.mxu0 %v632
        %v745 = vpop.f32.mrf.mxu0
        %v746 = vadd.f32 0.0, %v745
        %v747 = vpop.f32.mrf.mxu0
        %748 = vmatprep.mubr.f32.mxu0 0.0
        %749 = vmatmul.mubr.f32.gmra.mxu0 %v635
        %v750 = vpop.f32.mrf.mxu0
        %v751 = vadd.f32 0.0, %v750
        %v752 = vpop.f32.mrf.mxu0
        %753 = vmatprep.mubr.f32.mxu0 0.0
        %754 = vmatmul.mubr.f32.gmra.mxu0 %v638
        %v755 = vpop.f32.mrf.mxu0
        %v756 = vadd.f32 0.0, %v755
        %v757 = vpop.f32.mrf.mxu0
        %758 = vmatprep.mubr.f32.mxu0 0.0
        %759 = vmatmul.mubr.f32.gmra.mxu0 %v641
        %v760 = vpop.f32.mrf.mxu0
        %v761 = vadd.f32 0.0, %v760
        %v762 = vpop.f32.mrf.mxu0
        %763 = vmatprep.mubr.f32.mxu0 0.0
        %764 = vmatmul.mubr.f32.gmra.mxu0 %v644
        %v765 = vpop.f32.mrf.mxu0
        %v766 = vadd.f32 0.0, %v765
        %v767 = vpop.f32.mrf.mxu0
        %768 = vmatprep.mubr.f32.mxu0 0.0
        %769 = vmatmul.mubr.f32.gmra.mxu0 %v647
        %v770 = vpop.f32.mrf.mxu0
        %v771 = vadd.f32 0.0, %v770
        %v772 = vpop.f32.mrf.mxu0
        %773 = vmatprep.mubr.f32.mxu0 0.0
        %774 = vmatmul.mubr.f32.gmra.mxu0 %v650
        %v775 = vpop.f32.mrf.mxu0
        %v776 = vadd.f32 0.0, %v775
        %v777 = vpop.f32.mrf.mxu0
        %778 = vmatprep.mubr.f32.mxu0 0.0
        %779 = vmatmul.mubr.f32.gmra.mxu0 %v653
        %v780 = vpop.f32.mrf.mxu0
        %v781 = vadd.f32 0.0, %v780
        %v782 = vpop.f32.mrf.mxu0
        %783 = vmatprep.mubr.f32.mxu0 0.0
        %784 = vmatmul.mubr.f32.gmra.mxu0 %v656
        %v785 = vpop.f32.mrf.mxu0
        %v786 = vadd.f32 0.0, %v785
        %v787 = vpop.f32.mrf.mxu0
        %788 = vmatprep.mubr.f32.mxu0 0.0
        %789 = vmatmul.mubr.f32.gmra.mxu0 %v659
        %v790 = vpop.f32.mrf.mxu0
        %v791 = vadd.f32 0.0, %v790
        %v792 = vpop.f32.mrf.mxu0
        %793 = vmatprep.mubr.f32.mxu0 0.0
        %794 = vmatmul.mubr.f32.gmra.mxu0 %v662
        %v795 = vpop.f32.mrf.mxu0
        %v796 = vadd.f32 0.0, %v795
        %v797 = vpop.f32.mrf.mxu0
        %798 = vmatprep.mubr.f32.mxu0 0.0
        %799 = vmatmul.mubr.f32.gmra.mxu0 %v665
        %v800 = vpop.f32.mrf.mxu0
        %v801 = vadd.f32 0.0, %v800
        %v802 = vpop.f32.mrf.mxu0
        %803 = vmatprep.mubr.f32.mxu0 0.0
        %804 = vmatmul.mubr.f32.gmra.mxu0 %v668
        %v805 = vpop.f32.mrf.mxu0
        %v806 = vadd.f32 0.0, %v805
        %v807 = vpop.f32.mrf.mxu0
        %808 = vmatprep.mubr.f32.mxu0 0.0
        %809 = vmatmul.mubr.f32.gmra.mxu0 %v671
        %v810 = vpop.f32.mrf.mxu0
        %v811 = vadd.f32 0.0, %v810
        %v812 = vpop.f32.mrf.mxu0
        %813 = vmatprep.mubr.f32.mxu0 0.0
        %814 = vmatmul.mubr.f32.gmra.mxu0 %v674
        %v815 = vpop.f32.mrf.mxu0
        %v816 = vadd.f32 0.0, %v815
        %v817 = vpop.f32.mrf.mxu0
        %818 = vmatprep.mubr.f32.mxu0 0.0
        %819 = vmatmul.mubr.f32.gmra.mxu0 %v677
        %v820 = vpop.f32.mrf.mxu0
        %v821 = vadd.f32 0.0, %v820
        %v822 = vpop.f32.mrf.mxu0
        %823 = vdwg.mxu0
        %824 = vset.pattern.permute.xlu0 2
        %825 = vperm.xlu0 %824, %v259
        %v826 = vpop.permute.xlu0 %825
        %827 = vset.pattern.permute.xlu0 2
        %828 = vperm.xlu0 %827, %v260
        %v829 = vpop.permute.xlu0 %828
        %830 = vset.pattern.permute.xlu0 2
        %831 = vperm.xlu0 %830, %v261
        %v832 = vpop.permute.xlu0 %831
        %833 = vset.pattern.permute.xlu0 2
        %834 = vperm.xlu0 %833, %v262
        %v835 = vpop.permute.xlu0 %834
        %836 = vset.pattern.permute.xlu0 2
        %837 = vperm.xlu0 %836, %v263
        %v838 = vpop.permute.xlu0 %837
        %839 = vset.pattern.permute.xlu0 2
        %840 = vperm.xlu0 %839, %v264
        %v841 = vpop.permute.xlu0 %840
        %842 = vset.pattern.permute.xlu0 2
        %843 = vperm.xlu0 %842, %v265
        %v844 = vpop.permute.xlu0 %843
        %845 = vset.pattern.permute.xlu0 2
        %846 = vperm.xlu0 %845, %v266
        %v847 = vpop.permute.xlu0 %846
        %848 = vset.pattern.permute.xlu0 2
        %849 = vperm.xlu0 %848, %v267
        %v850 = vpop.permute.xlu0 %849
        %851 = vset.pattern.permute.xlu0 2
        %852 = vperm.xlu0 %851, %v268
        %v853 = vpop.permute.xlu0 %852
        %854 = vset.pattern.permute.xlu0 2
        %855 = vperm.xlu0 %854, %v269
        %v856 = vpop.permute.xlu0 %855
        %857 = vset.pattern.permute.xlu0 2
        %858 = vperm.xlu0 %857, %v270
        %v859 = vpop.permute.xlu0 %858
        %860 = vset.pattern.permute.xlu0 2
        %861 = vperm.xlu0 %860, %v271
        %v862 = vpop.permute.xlu0 %861
        %863 = vset.pattern.permute.xlu0 2
        %864 = vperm.xlu0 %863, %v272
        %v865 = vpop.permute.xlu0 %864
        %866 = vset.pattern.permute.xlu0 2
        %867 = vperm.xlu0 %866, %v273
        %v868 = vpop.permute.xlu0 %867
        %869 = vset.pattern.permute.xlu0 2
        %870 = vperm.xlu0 %869, %v274
        %v871 = vpop.permute.xlu0 %870
        %vm872 = vcmp.eq.s32.totalorder %v826, %v276
        %vm873 = vcmp.eq.s32.totalorder %v829, %v276
        %vm874 = vcmp.eq.s32.totalorder %v832, %v276
        %vm875 = vcmp.eq.s32.totalorder %v835, %v276
        %vm876 = vcmp.eq.s32.totalorder %v838, %v276
        %vm877 = vcmp.eq.s32.totalorder %v841, %v276
        %vm878 = vcmp.eq.s32.totalorder %v844, %v276
        %vm879 = vcmp.eq.s32.totalorder %v847, %v276
        %vm880 = vcmp.eq.s32.totalorder %v850, %v276
        %vm881 = vcmp.eq.s32.totalorder %v853, %v276
        %vm882 = vcmp.eq.s32.totalorder %v856, %v276
        %vm883 = vcmp.eq.s32.totalorder %v859, %v276
        %vm884 = vcmp.eq.s32.totalorder %v862, %v276
        %vm885 = vcmp.eq.s32.totalorder %v865, %v276
        %vm886 = vcmp.eq.s32.totalorder %v868, %v276
        %vm887 = vcmp.eq.s32.totalorder %v871, %v276
        %v888 = vsel %vm872, 1.0, 0.0
        %v889 = vsel %vm873, 1.0, 0.0
        %v890 = vsel %vm874, 1.0, 0.0
        %v891 = vsel %vm875, 1.0, 0.0
        %v892 = vsel %vm876, 1.0, 0.0
        %v893 = vsel %vm877, 1.0, 0.0
        %v894 = vsel %vm878, 1.0, 0.0
        %v895 = vsel %vm879, 1.0, 0.0
        %v896 = vsel %vm880, 1.0, 0.0
        %v897 = vsel %vm881, 1.0, 0.0
        %v898 = vsel %vm882, 1.0, 0.0
        %v899 = vsel %vm883, 1.0, 0.0
        %v900 = vsel %vm884, 1.0, 0.0
        %v901 = vsel %vm885, 1.0, 0.0
        %v902 = vsel %vm886, 1.0, 0.0
        %v903 = vsel %vm887, 1.0, 0.0
        %v905 = vsel %vm357, %v888, 0
        %v908 = vsel %vm357, %v889, 0
        %v911 = vsel %vm357, %v890, 0
        %v914 = vsel %vm357, %v891, 0
        %v917 = vsel %vm357, %v892, 0
        %v920 = vsel %vm357, %v893, 0
        %v923 = vsel %vm357, %v894, 0
        %v926 = vsel %vm357, %v895, 0
        %v929 = vsel %vm357, %v896, 0
        %v932 = vsel %vm357, %v897, 0
        %v935 = vsel %vm357, %v898, 0
        %v938 = vsel %vm357, %v899, 0
        %v941 = vsel %vm357, %v900, 0
        %v944 = vsel %vm357, %v901, 0
        %v947 = vsel %vm357, %v902, 0
        %v950 = vsel %vm357, %v903, 0
        %952 = vmatprep.subr.mxu0 0.0
        %953 = vmatpush1.msra.mxu0 0.0
        %954 = vmatprep.subr.mxu0 0.0
        %955 = vmatpush1.msra.mxu0 0.0
        %956 = vmatprep.subr.mxu0 0.0
        %957 = vmatpush1.msra.mxu0 0.0
        %958 = vmatprep.subr.mxu0 0.0
        %959 = vmatpush1.msra.mxu0 0.0
        %960 = vmatprep.subr.mxu0 0.0
        %961 = vmatpush1.msra.mxu0 0.0
        %962 = vmatprep.subr.mxu0 0.0
        %963 = vmatpush1.msra.mxu0 0.0
        %964 = vmatprep.subr.mxu0 0.0
        %965 = vmatpush1.msra.mxu0 0.0
        %966 = vmatprep.subr.mxu0 0.0
        %967 = vmatpush1.msra.mxu0 0.0
        %968 = vmatprep.subr.mxu0 0.0
        %969 = vmatpush1.msra.mxu0 0.0
        %970 = vmatprep.subr.mxu0 0.0
        %971 = vmatpush1.msra.mxu0 0.0
        %972 = vmatprep.subr.mxu0 0.0
        %973 = vmatpush1.msra.mxu0 0.0
        %974 = vmatprep.subr.mxu0 0.0
        %975 = vmatpush1.msra.mxu0 0.0
        %976 = vmatprep.subr.mxu0 0.0
        %977 = vmatpush1.msra.mxu0 0.0
        %978 = vmatprep.subr.mxu0 0.0
        %979 = vmatpush1.msra.mxu0 0.0
        %980 = vmatprep.subr.mxu0 0.0
        %981 = vmatpush1.msra.mxu0 %v258
        %982 = vmatprep.subr.mxu0 0.0
        %983 = vmatpush1.msra.mxu0 %v257
        %984 = vmatprep.subr.mxu0 0.0
        %985 = vmatpush2.msra.mxu0 0.0
        %986 = vmatprep.subr.mxu0 0.0
        %987 = vmatpush2.msra.mxu0 0.0
        %988 = vmatprep.subr.mxu0 0.0
        %989 = vmatpush2.msra.mxu0 0.0
        %990 = vmatprep.subr.mxu0 0.0
        %991 = vmatpush2.msra.mxu0 0.0
        %992 = vmatprep.subr.mxu0 0.0
        %993 = vmatpush2.msra.mxu0 0.0
        %994 = vmatprep.subr.mxu0 0.0
        %995 = vmatpush2.msra.mxu0 0.0
        %996 = vmatprep.subr.mxu0 0.0
        %997 = vmatpush2.msra.mxu0 0.0
        %998 = vmatprep.subr.mxu0 0.0
        %999 = vmatpush2.msra.mxu0 0.0
        %1000 = vmatprep.subr.mxu0 0.0
        %1001 = vmatpush2.msra.mxu0 0.0
        %1002 = vmatprep.subr.mxu0 0.0
        %1003 = vmatpush2.msra.mxu0 0.0
        %1004 = vmatprep.subr.mxu0 0.0
        %1005 = vmatpush2.msra.mxu0 0.0
        %1006 = vmatprep.subr.mxu0 0.0
        %1007 = vmatpush2.msra.mxu0 0.0
        %1008 = vmatprep.subr.mxu0 0.0
        %1009 = vmatpush2.msra.mxu0 0.0
        %1010 = vmatprep.subr.mxu0 0.0
        %1011 = vmatpush2.msra.mxu0 0.0
        %1012 = vmatprep.subr.mxu0 0.0
        %1013 = vmatpush2.msra.mxu0 0.0
        %1014 = vmatprep.subr.mxu0 0.0
        %1015 = vmatpush2.msra.mxu0 0.0
        %1016 = vmatprep.mubr.f32.mxu0 0.0
        %1017 = vmatmul.mubr.f32.gmra.mxu0 %v905
        %v1018 = vpop.f32.mrf.mxu0
        %v1019 = vadd.f32 0.0, %v1018
        %v1020 = vpop.f32.mrf.mxu0
        %1021 = vmatprep.mubr.f32.mxu0 0.0
        %1022 = vmatmul.mubr.f32.gmra.mxu0 %v908
        %v1023 = vpop.f32.mrf.mxu0
        %v1024 = vadd.f32 0.0, %v1023
        %v1025 = vpop.f32.mrf.mxu0
        %1026 = vmatprep.mubr.f32.mxu0 0.0
        %1027 = vmatmul.mubr.f32.gmra.mxu0 %v911
        %v1028 = vpop.f32.mrf.mxu0
        %v1029 = vadd.f32 0.0, %v1028
        %v1030 = vpop.f32.mrf.mxu0
        %1031 = vmatprep.mubr.f32.mxu0 0.0
        %1032 = vmatmul.mubr.f32.gmra.mxu0 %v914
        %v1033 = vpop.f32.mrf.mxu0
        %v1034 = vadd.f32 0.0, %v1033
        %v1035 = vpop.f32.mrf.mxu0
        %1036 = vmatprep.mubr.f32.mxu0 0.0
        %1037 = vmatmul.mubr.f32.gmra.mxu0 %v917
        %v1038 = vpop.f32.mrf.mxu0
        %v1039 = vadd.f32 0.0, %v1038
        %v1040 = vpop.f32.mrf.mxu0
        %1041 = vmatprep.mubr.f32.mxu0 0.0
        %1042 = vmatmul.mubr.f32.gmra.mxu0 %v920
        %v1043 = vpop.f32.mrf.mxu0
        %v1044 = vadd.f32 0.0, %v1043
        %v1045 = vpop.f32.mrf.mxu0
        %1046 = vmatprep.mubr.f32.mxu0 0.0
        %1047 = vmatmul.mubr.f32.gmra.mxu0 %v923
        %v1048 = vpop.f32.mrf.mxu0
        %v1049 = vadd.f32 0.0, %v1048
        %v1050 = vpop.f32.mrf.mxu0
        %1051 = vmatprep.mubr.f32.mxu0 0.0
        %1052 = vmatmul.mubr.f32.gmra.mxu0 %v926
        %v1053 = vpop.f32.mrf.mxu0
        %v1054 = vadd.f32 0.0, %v1053
        %v1055 = vpop.f32.mrf.mxu0
        %1056 = vmatprep.mubr.f32.mxu0 0.0
        %1057 = vmatmul.mubr.f32.gmra.mxu0 %v929
        %v1058 = vpop.f32.mrf.mxu0
        %v1059 = vadd.f32 0.0, %v1058
        %v1060 = vpop.f32.mrf.mxu0
        %1061 = vmatprep.mubr.f32.mxu0 0.0
        %1062 = vmatmul.mubr.f32.gmra.mxu0 %v932
        %v1063 = vpop.f32.mrf.mxu0
        %v1064 = vadd.f32 0.0, %v1063
        %v1065 = vpop.f32.mrf.mxu0
        %1066 = vmatprep.mubr.f32.mxu0 0.0
        %1067 = vmatmul.mubr.f32.gmra.mxu0 %v935
        %v1068 = vpop.f32.mrf.mxu0
        %v1069 = vadd.f32 0.0, %v1068
        %v1070 = vpop.f32.mrf.mxu0
        %1071 = vmatprep.mubr.f32.mxu0 0.0
        %1072 = vmatmul.mubr.f32.gmra.mxu0 %v938
        %v1073 = vpop.f32.mrf.mxu0
        %v1074 = vadd.f32 0.0, %v1073
        %v1075 = vpop.f32.mrf.mxu0
        %1076 = vmatprep.mubr.f32.mxu0 0.0
        %1077 = vmatmul.mubr.f32.gmra.mxu0 %v941
        %v1078 = vpop.f32.mrf.mxu0
        %v1079 = vadd.f32 0.0, %v1078
        %v1080 = vpop.f32.mrf.mxu0
        %1081 = vmatprep.mubr.f32.mxu0 0.0
        %1082 = vmatmul.mubr.f32.gmra.mxu0 %v944
        %v1083 = vpop.f32.mrf.mxu0
        %v1084 = vadd.f32 0.0, %v1083
        %v1085 = vpop.f32.mrf.mxu0
        %1086 = vmatprep.mubr.f32.mxu0 0.0
        %1087 = vmatmul.mubr.f32.gmra.mxu0 %v947
        %v1088 = vpop.f32.mrf.mxu0
        %v1089 = vadd.f32 0.0, %v1088
        %v1090 = vpop.f32.mrf.mxu0
        %1091 = vmatprep.mubr.f32.mxu0 0.0
        %1092 = vmatmul.mubr.f32.gmra.mxu0 %v950
        %v1093 = vpop.f32.mrf.mxu0
        %v1094 = vadd.f32 0.0, %v1093
        %v1095 = vpop.f32.mrf.mxu0
        %1096 = vdwg.mxu0
        %1097 = vset.pattern.permute.xlu0 3
        %1098 = vperm.xlu0 %1097, %v259
        %v1099 = vpop.permute.xlu0 %1098
        %1100 = vset.pattern.permute.xlu0 3
        %1101 = vperm.xlu0 %1100, %v260
        %v1102 = vpop.permute.xlu0 %1101
        %1103 = vset.pattern.permute.xlu0 3
        %1104 = vperm.xlu0 %1103, %v261
        %v1105 = vpop.permute.xlu0 %1104
        %1106 = vset.pattern.permute.xlu0 3
        %1107 = vperm.xlu0 %1106, %v262
        %v1108 = vpop.permute.xlu0 %1107
        %1109 = vset.pattern.permute.xlu0 3
        %1110 = vperm.xlu0 %1109, %v263
        %v1111 = vpop.permute.xlu0 %1110
        %1112 = vset.pattern.permute.xlu0 3
        %1113 = vperm.xlu0 %1112, %v264
        %v1114 = vpop.permute.xlu0 %1113
        %1115 = vset.pattern.permute.xlu0 3
        %1116 = vperm.xlu0 %1115, %v265
        %v1117 = vpop.permute.xlu0 %1116
        %1118 = vset.pattern.permute.xlu0 3
        %1119 = vperm.xlu0 %1118, %v266
        %v1120 = vpop.permute.xlu0 %1119
        %1121 = vset.pattern.permute.xlu0 3
        %1122 = vperm.xlu0 %1121, %v267
        %v1123 = vpop.permute.xlu0 %1122
        %1124 = vset.pattern.permute.xlu0 3
        %1125 = vperm.xlu0 %1124, %v268
        %v1126 = vpop.permute.xlu0 %1125
        %1127 = vset.pattern.permute.xlu0 3
        %1128 = vperm.xlu0 %1127, %v269
        %v1129 = vpop.permute.xlu0 %1128
        %1130 = vset.pattern.permute.xlu0 3
        %1131 = vperm.xlu0 %1130, %v270
        %v1132 = vpop.permute.xlu0 %1131
        %1133 = vset.pattern.permute.xlu0 3
        %1134 = vperm.xlu0 %1133, %v271
        %v1135 = vpop.permute.xlu0 %1134
        %1136 = vset.pattern.permute.xlu0 3
        %1137 = vperm.xlu0 %1136, %v272
        %v1138 = vpop.permute.xlu0 %1137
        %1139 = vset.pattern.permute.xlu0 3
        %1140 = vperm.xlu0 %1139, %v273
        %v1141 = vpop.permute.xlu0 %1140
        %1142 = vset.pattern.permute.xlu0 3
        %1143 = vperm.xlu0 %1142, %v274
        %v1144 = vpop.permute.xlu0 %1143
        %vm1145 = vcmp.eq.s32.totalorder %v1099, %v276
        %vm1146 = vcmp.eq.s32.totalorder %v1102, %v276
        %vm1147 = vcmp.eq.s32.totalorder %v1105, %v276
        %vm1148 = vcmp.eq.s32.totalorder %v1108, %v276
        %vm1149 = vcmp.eq.s32.totalorder %v1111, %v276
        %vm1150 = vcmp.eq.s32.totalorder %v1114, %v276
        %vm1151 = vcmp.eq.s32.totalorder %v1117, %v276
        %vm1152 = vcmp.eq.s32.totalorder %v1120, %v276
        %vm1153 = vcmp.eq.s32.totalorder %v1123, %v276
        %vm1154 = vcmp.eq.s32.totalorder %v1126, %v276
        %vm1155 = vcmp.eq.s32.totalorder %v1129, %v276
        %vm1156 = vcmp.eq.s32.totalorder %v1132, %v276
        %vm1157 = vcmp.eq.s32.totalorder %v1135, %v276
        %vm1158 = vcmp.eq.s32.totalorder %v1138, %v276
        %vm1159 = vcmp.eq.s32.totalorder %v1141, %v276
        %vm1160 = vcmp.eq.s32.totalorder %v1144, %v276
        %v1161 = vsel %vm1145, 1.0, 0.0
        %v1162 = vsel %vm1146, 1.0, 0.0
        %v1163 = vsel %vm1147, 1.0, 0.0
        %v1164 = vsel %vm1148, 1.0, 0.0
        %v1165 = vsel %vm1149, 1.0, 0.0
        %v1166 = vsel %vm1150, 1.0, 0.0
        %v1167 = vsel %vm1151, 1.0, 0.0
        %v1168 = vsel %vm1152, 1.0, 0.0
        %v1169 = vsel %vm1153, 1.0, 0.0
        %v1170 = vsel %vm1154, 1.0, 0.0
        %v1171 = vsel %vm1155, 1.0, 0.0
        %v1172 = vsel %vm1156, 1.0, 0.0
        %v1173 = vsel %vm1157, 1.0, 0.0
        %v1174 = vsel %vm1158, 1.0, 0.0
        %v1175 = vsel %vm1159, 1.0, 0.0
        %v1176 = vsel %vm1160, 1.0, 0.0
        %v1178 = vsel %vm357, %v1161, 0
        %v1181 = vsel %vm357, %v1162, 0
        %v1184 = vsel %vm357, %v1163, 0
        %v1187 = vsel %vm357, %v1164, 0
        %v1190 = vsel %vm357, %v1165, 0
        %v1193 = vsel %vm357, %v1166, 0
        %v1196 = vsel %vm357, %v1167, 0
        %v1199 = vsel %vm357, %v1168, 0
        %v1202 = vsel %vm357, %v1169, 0
        %v1205 = vsel %vm357, %v1170, 0
        %v1208 = vsel %vm357, %v1171, 0
        %v1211 = vsel %vm357, %v1172, 0
        %v1214 = vsel %vm357, %v1173, 0
        %v1217 = vsel %vm357, %v1174, 0
        %v1220 = vsel %vm357, %v1175, 0
        %v1223 = vsel %vm357, %v1176, 0
        %1225 = vmatprep.subr.mxu0 0.0
        %1226 = vmatpush1.msra.mxu0 0.0
        %1227 = vmatprep.subr.mxu0 0.0
        %1228 = vmatpush1.msra.mxu0 0.0
        %1229 = vmatprep.subr.mxu0 0.0
        %1230 = vmatpush1.msra.mxu0 0.0
        %1231 = vmatprep.subr.mxu0 0.0
        %1232 = vmatpush1.msra.mxu0 0.0
        %1233 = vmatprep.subr.mxu0 0.0
        %1234 = vmatpush1.msra.mxu0 0.0
        %1235 = vmatprep.subr.mxu0 0.0
        %1236 = vmatpush1.msra.mxu0 0.0
        %1237 = vmatprep.subr.mxu0 0.0
        %1238 = vmatpush1.msra.mxu0 0.0
        %1239 = vmatprep.subr.mxu0 0.0
        %1240 = vmatpush1.msra.mxu0 0.0
        %1241 = vmatprep.subr.mxu0 0.0
        %1242 = vmatpush1.msra.mxu0 0.0
        %1243 = vmatprep.subr.mxu0 0.0
        %1244 = vmatpush1.msra.mxu0 0.0
        %1245 = vmatprep.subr.mxu0 0.0
        %1246 = vmatpush1.msra.mxu0 0.0
        %1247 = vmatprep.subr.mxu0 0.0
        %1248 = vmatpush1.msra.mxu0 0.0
        %1249 = vmatprep.subr.mxu0 0.0
        %1250 = vmatpush1.msra.mxu0 0.0
        %1251 = vmatprep.subr.mxu0 0.0
        %1252 = vmatpush1.msra.mxu0 0.0
        %1253 = vmatprep.subr.mxu0 0.0
        %1254 = vmatpush1.msra.mxu0 %v258
        %1255 = vmatprep.subr.mxu0 0.0
        %1256 = vmatpush1.msra.mxu0 %v257
        %1257 = vmatprep.subr.mxu0 0.0
        %1258 = vmatpush2.msra.mxu0 0.0
        %1259 = vmatprep.subr.mxu0 0.0
        %1260 = vmatpush2.msra.mxu0 0.0
        %1261 = vmatprep.subr.mxu0 0.0
        %1262 = vmatpush2.msra.mxu0 0.0
        %1263 = vmatprep.subr.mxu0 0.0
        %1264 = vmatpush2.msra.mxu0 0.0
        %1265 = vmatprep.subr.mxu0 0.0
        %1266 = vmatpush2.msra.mxu0 0.0
        %1267 = vmatprep.subr.mxu0 0.0
        %1268 = vmatpush2.msra.mxu0 0.0
        %1269 = vmatprep.subr.mxu0 0.0
        %1270 = vmatpush2.msra.mxu0 0.0
        %1271 = vmatprep.subr.mxu0 0.0
        %1272 = vmatpush2.msra.mxu0 0.0
        %1273 = vmatprep.subr.mxu0 0.0
        %1274 = vmatpush2.msra.mxu0 0.0
        %1275 = vmatprep.subr.mxu0 0.0
        %1276 = vmatpush2.msra.mxu0 0.0
        %1277 = vmatprep.subr.mxu0 0.0
        %1278 = vmatpush2.msra.mxu0 0.0
        %1279 = vmatprep.subr.mxu0 0.0
        %1280 = vmatpush2.msra.mxu0 0.0
        %1281 = vmatprep.subr.mxu0 0.0
        %1282 = vmatpush2.msra.mxu0 0.0
        %1283 = vmatprep.subr.mxu0 0.0
        %1284 = vmatpush2.msra.mxu0 0.0
        %1285 = vmatprep.subr.mxu0 0.0
        %1286 = vmatpush2.msra.mxu0 0.0
        %1287 = vmatprep.subr.mxu0 0.0
        %1288 = vmatpush2.msra.mxu0 0.0
        %1289 = vmatprep.mubr.f32.mxu0 0.0
        %1290 = vmatmul.mubr.f32.gmra.mxu0 %v1178
        %v1291 = vpop.f32.mrf.mxu0
        %v1292 = vadd.f32 0.0, %v1291
        %v1293 = vpop.f32.mrf.mxu0
        %1294 = vmatprep.mubr.f32.mxu0 0.0
        %1295 = vmatmul.mubr.f32.gmra.mxu0 %v1181
        %v1296 = vpop.f32.mrf.mxu0
        %v1297 = vadd.f32 0.0, %v1296
        %v1298 = vpop.f32.mrf.mxu0
        %1299 = vmatprep.mubr.f32.mxu0 0.0
        %1300 = vmatmul.mubr.f32.gmra.mxu0 %v1184
        %v1301 = vpop.f32.mrf.mxu0
        %v1302 = vadd.f32 0.0, %v1301
        %v1303 = vpop.f32.mrf.mxu0
        %1304 = vmatprep.mubr.f32.mxu0 0.0
        %1305 = vmatmul.mubr.f32.gmra.mxu0 %v1187
        %v1306 = vpop.f32.mrf.mxu0
        %v1307 = vadd.f32 0.0, %v1306
        %v1308 = vpop.f32.mrf.mxu0
        %1309 = vmatprep.mubr.f32.mxu0 0.0
        %1310 = vmatmul.mubr.f32.gmra.mxu0 %v1190
        %v1311 = vpop.f32.mrf.mxu0
        %v1312 = vadd.f32 0.0, %v1311
        %v1313 = vpop.f32.mrf.mxu0
        %1314 = vmatprep.mubr.f32.mxu0 0.0
        %1315 = vmatmul.mubr.f32.gmra.mxu0 %v1193
        %v1316 = vpop.f32.mrf.mxu0
        %v1317 = vadd.f32 0.0, %v1316
        %v1318 = vpop.f32.mrf.mxu0
        %1319 = vmatprep.mubr.f32.mxu0 0.0
        %1320 = vmatmul.mubr.f32.gmra.mxu0 %v1196
        %v1321 = vpop.f32.mrf.mxu0
        %v1322 = vadd.f32 0.0, %v1321
        %v1323 = vpop.f32.mrf.mxu0
        %1324 = vmatprep.mubr.f32.mxu0 0.0
        %1325 = vmatmul.mubr.f32.gmra.mxu0 %v1199
        %v1326 = vpop.f32.mrf.mxu0
        %v1327 = vadd.f32 0.0, %v1326
        %v1328 = vpop.f32.mrf.mxu0
        %1329 = vmatprep.mubr.f32.mxu0 0.0
        %1330 = vmatmul.mubr.f32.gmra.mxu0 %v1202
        %v1331 = vpop.f32.mrf.mxu0
        %v1332 = vadd.f32 0.0, %v1331
        %v1333 = vpop.f32.mrf.mxu0
        %1334 = vmatprep.mubr.f32.mxu0 0.0
        %1335 = vmatmul.mubr.f32.gmra.mxu0 %v1205
        %v1336 = vpop.f32.mrf.mxu0
        %v1337 = vadd.f32 0.0, %v1336
        %v1338 = vpop.f32.mrf.mxu0
        %1339 = vmatprep.mubr.f32.mxu0 0.0
        %1340 = vmatmul.mubr.f32.gmra.mxu0 %v1208
        %v1341 = vpop.f32.mrf.mxu0
        %v1342 = vadd.f32 0.0, %v1341
        %v1343 = vpop.f32.mrf.mxu0
        %1344 = vmatprep.mubr.f32.mxu0 0.0
        %1345 = vmatmul.mubr.f32.gmra.mxu0 %v1211
        %v1346 = vpop.f32.mrf.mxu0
        %v1347 = vadd.f32 0.0, %v1346
        %v1348 = vpop.f32.mrf.mxu0
        %1349 = vmatprep.mubr.f32.mxu0 0.0
        %1350 = vmatmul.mubr.f32.gmra.mxu0 %v1214
        %v1351 = vpop.f32.mrf.mxu0
        %v1352 = vadd.f32 0.0, %v1351
        %v1353 = vpop.f32.mrf.mxu0
        %1354 = vmatprep.mubr.f32.mxu0 0.0
        %1355 = vmatmul.mubr.f32.gmra.mxu0 %v1217
        %v1356 = vpop.f32.mrf.mxu0
        %v1357 = vadd.f32 0.0, %v1356
        %v1358 = vpop.f32.mrf.mxu0
        %1359 = vmatprep.mubr.f32.mxu0 0.0
        %1360 = vmatmul.mubr.f32.gmra.mxu0 %v1220
        %v1361 = vpop.f32.mrf.mxu0
        %v1362 = vadd.f32 0.0, %v1361
        %v1363 = vpop.f32.mrf.mxu0
        %1364 = vmatprep.mubr.f32.mxu0 0.0
        %1365 = vmatmul.mubr.f32.gmra.mxu0 %v1223
        %v1366 = vpop.f32.mrf.mxu0
        %v1367 = vadd.f32 0.0, %v1366
        %v1368 = vpop.f32.mrf.mxu0
        %1369 = vdwg.mxu0
        %v1370 = vld [vmem:[%s2] sm:$0xff]
        %v1371 = vld [vmem:[%s2 + $0x8] sm:$0xff]
        %v1372 = vld [vmem:[%s2 + $0x10] sm:$0xff]
        %v1373 = vld [vmem:[%s2 + $0x18] sm:$0xff]
        %v1374 = vld [vmem:[%s2 + $0x20] sm:$0xff]
        %v1375 = vld [vmem:[%s2 + $0x28] sm:$0xff]
        %v1376 = vld [vmem:[%s2 + $0x30] sm:$0xff]
        %v1377 = vld [vmem:[%s2 + $0x38] sm:$0xff]
        %v1378 = vld [vmem:[%s2 + $0x40] sm:$0xff]
        %v1379 = vld [vmem:[%s2 + $0x48] sm:$0xff]
        %v1380 = vld [vmem:[%s2 + $0x50] sm:$0xff]
        %v1381 = vld [vmem:[%s2 + $0x58] sm:$0xff]
        %v1382 = vld [vmem:[%s2 + $0x60] sm:$0xff]
        %v1383 = vld [vmem:[%s2 + $0x68] sm:$0xff]
        %v1384 = vld [vmem:[%s2 + $0x70] sm:$0xff]
        %v1385 = vld [vmem:[%s2 + $0x78] sm:$0xff]
        %v1386 = vld [vmem:[%s2 + $0x80] sm:$0xff]
        %v1387 = vld [vmem:[%s2 + $0x88] sm:$0xff]
        %v1388 = vld [vmem:[%s2 + $0x90] sm:$0xff]
        %v1389 = vld [vmem:[%s2 + $0x98] sm:$0xff]
        %v1390 = vld [vmem:[%s2 + $0xa0] sm:$0xff]
        %v1391 = vld [vmem:[%s2 + $0xa8] sm:$0xff]
        %v1392 = vld [vmem:[%s2 + $0xb0] sm:$0xff]
        %v1393 = vld [vmem:[%s2 + $0xb8] sm:$0xff]
        %v1394 = vld [vmem:[%s2 + $0xc0] sm:$0xff]
        %v1395 = vld [vmem:[%s2 + $0xc8] sm:$0xff]
        %v1396 = vld [vmem:[%s2 + $0xd0] sm:$0xff]
        %v1397 = vld [vmem:[%s2 + $0xd8] sm:$0xff]
        %v1398 = vld [vmem:[%s2 + $0xe0] sm:$0xff]
        %v1399 = vld [vmem:[%s2 + $0xe8] sm:$0xff]
        %v1400 = vld [vmem:[%s2 + $0xf0] sm:$0xff]
        %v1401 = vld [vmem:[%s2 + $0xf8] sm:$0xff]
        %1402 = vmatprep.subr.mxu0 0.0
        %1403 = vmatpush1.msra.mxu0 %v1385
        %1404 = vmatprep.subr.mxu0 0.0
        %1405 = vmatpush1.msra.mxu0 %v1384
        %1406 = vmatprep.subr.mxu0 0.0
        %1407 = vmatpush1.msra.mxu0 %v1383
        %1408 = vmatprep.subr.mxu0 0.0
        %1409 = vmatpush1.msra.mxu0 %v1382
        %1410 = vmatprep.subr.mxu0 0.0
        %1411 = vmatpush1.msra.mxu0 %v1381
        %1412 = vmatprep.subr.mxu0 0.0
        %1413 = vmatpush1.msra.mxu0 %v1380
        %1414 = vmatprep.subr.mxu0 0.0
        %1415 = vmatpush1.msra.mxu0 %v1379
        %1416 = vmatprep.subr.mxu0 0.0
        %1417 = vmatpush1.msra.mxu0 %v1378
        %1418 = vmatprep.subr.mxu0 0.0
        %1419 = vmatpush1.msra.mxu0 %v1377
        %1420 = vmatprep.subr.mxu0 0.0
        %1421 = vmatpush1.msra.mxu0 %v1376
        %1422 = vmatprep.subr.mxu0 0.0
        %1423 = vmatpush1.msra.mxu0 %v1375
        %1424 = vmatprep.subr.mxu0 0.0
        %1425 = vmatpush1.msra.mxu0 %v1374
        %1426 = vmatprep.subr.mxu0 0.0
        %1427 = vmatpush1.msra.mxu0 %v1373
        %1428 = vmatprep.subr.mxu0 0.0
        %1429 = vmatpush1.msra.mxu0 %v1372
        %1430 = vmatprep.subr.mxu0 0.0
        %1431 = vmatpush1.msra.mxu0 %v1371
        %1432 = vmatprep.subr.mxu0 0.0
        %1433 = vmatpush1.msra.mxu0 %v1370
        %1434 = vmatprep.subr.mxu0 0.0
        %1435 = vmatpush2.msra.mxu0 %v1401
        %1436 = vmatprep.subr.mxu0 0.0
        %1437 = vmatpush2.msra.mxu0 %v1400
        %1438 = vmatprep.subr.mxu0 0.0
        %1439 = vmatpush2.msra.mxu0 %v1399
        %1440 = vmatprep.subr.mxu0 0.0
        %1441 = vmatpush2.msra.mxu0 %v1398
        %1442 = vmatprep.subr.mxu0 0.0
        %1443 = vmatpush2.msra.mxu0 %v1397
        %1444 = vmatprep.subr.mxu0 0.0
        %1445 = vmatpush2.msra.mxu0 %v1396
        %1446 = vmatprep.subr.mxu0 0.0
        %1447 = vmatpush2.msra.mxu0 %v1395
        %1448 = vmatprep.subr.mxu0 0.0
        %1449 = vmatpush2.msra.mxu0 %v1394
        %1450 = vmatprep.subr.mxu0 0.0
        %1451 = vmatpush2.msra.mxu0 %v1393
        %1452 = vmatprep.subr.mxu0 0.0
        %1453 = vmatpush2.msra.mxu0 %v1392
        %1454 = vmatprep.subr.mxu0 0.0
        %1455 = vmatpush2.msra.mxu0 %v1391
        %1456 = vmatprep.subr.mxu0 0.0
        %1457 = vmatpush2.msra.mxu0 %v1390
        %1458 = vmatprep.subr.mxu0 0.0
        %1459 = vmatpush2.msra.mxu0 %v1389
        %1460 = vmatprep.subr.mxu0 0.0
        %1461 = vmatpush2.msra.mxu0 %v1388
        %1462 = vmatprep.subr.mxu0 0.0
        %1463 = vmatpush2.msra.mxu0 %v1387
        %1464 = vmatprep.subr.mxu0 0.0
        %1465 = vmatpush2.msra.mxu0 %v1386
        %1466 = vmatprep.mubr.f32.mxu0 %v746
        %1467 = vmatmul.mubr.f32.gmra.mxu0 %v473
        %v1468 = vpop.f32.mrf.mxu0
        %v1469 = vadd.f32 0.0, %v1468
        %v1470 = vpop.f32.mrf.mxu0
        %1471 = vmatprep.mubr.f32.mxu0 %v751
        %1472 = vmatmul.mubr.f32.gmra.mxu0 %v478
        %v1473 = vpop.f32.mrf.mxu0
        %v1474 = vadd.f32 0.0, %v1473
        %v1475 = vpop.f32.mrf.mxu0
        %1476 = vmatprep.mubr.f32.mxu0 %v756
        %1477 = vmatmul.mubr.f32.gmra.mxu0 %v483
        %v1478 = vpop.f32.mrf.mxu0
        %v1479 = vadd.f32 0.0, %v1478
        %v1480 = vpop.f32.mrf.mxu0
        %1481 = vmatprep.mubr.f32.mxu0 %v761
        %1482 = vmatmul.mubr.f32.gmra.mxu0 %v488
        %v1483 = vpop.f32.mrf.mxu0
        %v1484 = vadd.f32 0.0, %v1483
        %v1485 = vpop.f32.mrf.mxu0
        %1486 = vmatprep.mubr.f32.mxu0 %v766
        %1487 = vmatmul.mubr.f32.gmra.mxu0 %v493
        %v1488 = vpop.f32.mrf.mxu0
        %v1489 = vadd.f32 0.0, %v1488
        %v1490 = vpop.f32.mrf.mxu0
        %1491 = vmatprep.mubr.f32.mxu0 %v771
        %1492 = vmatmul.mubr.f32.gmra.mxu0 %v498
        %v1493 = vpop.f32.mrf.mxu0
        %v1494 = vadd.f32 0.0, %v1493
        %v1495 = vpop.f32.mrf.mxu0
        %1496 = vmatprep.mubr.f32.mxu0 %v776
        %1497 = vmatmul.mubr.f32.gmra.mxu0 %v503
        %v1498 = vpop.f32.mrf.mxu0
        %v1499 = vadd.f32 0.0, %v1498
        %v1500 = vpop.f32.mrf.mxu0
        %1501 = vmatprep.mubr.f32.mxu0 %v781
        %1502 = vmatmul.mubr.f32.gmra.mxu0 %v508
        %v1503 = vpop.f32.mrf.mxu0
        %v1504 = vadd.f32 0.0, %v1503
        %v1505 = vpop.f32.mrf.mxu0
        %1506 = vmatprep.mubr.f32.mxu0 %v786
        %1507 = vmatmul.mubr.f32.gmra.mxu0 %v513
        %v1508 = vpop.f32.mrf.mxu0
        %v1509 = vadd.f32 0.0, %v1508
        %v1510 = vpop.f32.mrf.mxu0
        %1511 = vmatprep.mubr.f32.mxu0 %v791
        %1512 = vmatmul.mubr.f32.gmra.mxu0 %v518
        %v1513 = vpop.f32.mrf.mxu0
        %v1514 = vadd.f32 0.0, %v1513
        %v1515 = vpop.f32.mrf.mxu0
        %1516 = vmatprep.mubr.f32.mxu0 %v796
        %1517 = vmatmul.mubr.f32.gmra.mxu0 %v523
        %v1518 = vpop.f32.mrf.mxu0
        %v1519 = vadd.f32 0.0, %v1518
        %v1520 = vpop.f32.mrf.mxu0
        %1521 = vmatprep.mubr.f32.mxu0 %v801
        %1522 = vmatmul.mubr.f32.gmra.mxu0 %v528
        %v1523 = vpop.f32.mrf.mxu0
        %v1524 = vadd.f32 0.0, %v1523
        %v1525 = vpop.f32.mrf.mxu0
        %1526 = vmatprep.mubr.f32.mxu0 %v806
        %1527 = vmatmul.mubr.f32.gmra.mxu0 %v533
        %v1528 = vpop.f32.mrf.mxu0
        %v1529 = vadd.f32 0.0, %v1528
        %v1530 = vpop.f32.mrf.mxu0
        %1531 = vmatprep.mubr.f32.mxu0 %v811
        %1532 = vmatmul.mubr.f32.gmra.mxu0 %v538
        %v1533 = vpop.f32.mrf.mxu0
        %v1534 = vadd.f32 0.0, %v1533
        %v1535 = vpop.f32.mrf.mxu0
        %1536 = vmatprep.mubr.f32.mxu0 %v816
        %1537 = vmatmul.mubr.f32.gmra.mxu0 %v543
        %v1538 = vpop.f32.mrf.mxu0
        %v1539 = vadd.f32 0.0, %v1538
        %v1540 = vpop.f32.mrf.mxu0
        %1541 = vmatprep.mubr.f32.mxu0 %v821
        %1542 = vmatmul.mubr.f32.gmra.mxu0 %v548
        %v1543 = vpop.f32.mrf.mxu0
        %v1544 = vadd.f32 0.0, %v1543
        %v1545 = vpop.f32.mrf.mxu0
        %1546 = vmatprep.mubr.f32.mxu0 %v1292
        %1547 = vmatmul.mubr.f32.gmra.mxu0 %v1019
        %v1548 = vpop.f32.mrf.mxu0
        %v1549 = vadd.f32 0.0, %v1548
        %v1550 = vpop.f32.mrf.mxu0
        %1551 = vmatprep.mubr.f32.mxu0 %v1297
        %1552 = vmatmul.mubr.f32.gmra.mxu0 %v1024
        %v1553 = vpop.f32.mrf.mxu0
        %v1554 = vadd.f32 0.0, %v1553
        %v1555 = vpop.f32.mrf.mxu0
        %1556 = vmatprep.mubr.f32.mxu0 %v1302
        %1557 = vmatmul.mubr.f32.gmra.mxu0 %v1029
        %v1558 = vpop.f32.mrf.mxu0
        %v1559 = vadd.f32 0.0, %v1558
        %v1560 = vpop.f32.mrf.mxu0
        %1561 = vmatprep.mubr.f32.mxu0 %v1307
        %1562 = vmatmul.mubr.f32.gmra.mxu0 %v1034
        %v1563 = vpop.f32.mrf.mxu0
        %v1564 = vadd.f32 0.0, %v1563
        %v1565 = vpop.f32.mrf.mxu0
        %1566 = vmatprep.mubr.f32.mxu0 %v1312
        %1567 = vmatmul.mubr.f32.gmra.mxu0 %v1039
        %v1568 = vpop.f32.mrf.mxu0
        %v1569 = vadd.f32 0.0, %v1568
        %v1570 = vpop.f32.mrf.mxu0
        %1571 = vmatprep.mubr.f32.mxu0 %v1317
        %1572 = vmatmul.mubr.f32.gmra.mxu0 %v1044
        %v1573 = vpop.f32.mrf.mxu0
        %v1574 = vadd.f32 0.0, %v1573
        %v1575 = vpop.f32.mrf.mxu0
        %1576 = vmatprep.mubr.f32.mxu0 %v1322
        %1577 = vmatmul.mubr.f32.gmra.mxu0 %v1049
        %v1578 = vpop.f32.mrf.mxu0
        %v1579 = vadd.f32 0.0, %v1578
        %v1580 = vpop.f32.mrf.mxu0
        %1581 = vmatprep.mubr.f32.mxu0 %v1327
        %1582 = vmatmul.mubr.f32.gmra.mxu0 %v1054
        %v1583 = vpop.f32.mrf.mxu0
        %v1584 = vadd.f32 0.0, %v1583
        %v1585 = vpop.f32.mrf.mxu0
        %1586 = vmatprep.mubr.f32.mxu0 %v1332
        %1587 = vmatmul.mubr.f32.gmra.mxu0 %v1059
        %v1588 = vpop.f32.mrf.mxu0
        %v1589 = vadd.f32 0.0, %v1588
        %v1590 = vpop.f32.mrf.mxu0
        %1591 = vmatprep.mubr.f32.mxu0 %v1337
        %1592 = vmatmul.mubr.f32.gmra.mxu0 %v1064
        %v1593 = vpop.f32.mrf.mxu0
        %v1594 = vadd.f32 0.0, %v1593
        %v1595 = vpop.f32.mrf.mxu0
        %1596 = vmatprep.mubr.f32.mxu0 %v1342
        %1597 = vmatmul.mubr.f32.gmra.mxu0 %v1069
        %v1598 = vpop.f32.mrf.mxu0
        %v1599 = vadd.f32 0.0, %v1598
        %v1600 = vpop.f32.mrf.mxu0
        %1601 = vmatprep.mubr.f32.mxu0 %v1347
        %1602 = vmatmul.mubr.f32.gmra.mxu0 %v1074
        %v1603 = vpop.f32.mrf.mxu0
        %v1604 = vadd.f32 0.0, %v1603
        %v1605 = vpop.f32.mrf.mxu0
        %1606 = vmatprep.mubr.f32.mxu0 %v1352
        %1607 = vmatmul.mubr.f32.gmra.mxu0 %v1079
        %v1608 = vpop.f32.mrf.mxu0
        %v1609 = vadd.f32 0.0, %v1608
        %v1610 = vpop.f32.mrf.mxu0
        %1611 = vmatprep.mubr.f32.mxu0 %v1357
        %1612 = vmatmul.mubr.f32.gmra.mxu0 %v1084
        %v1613 = vpop.f32.mrf.mxu0
        %v1614 = vadd.f32 0.0, %v1613
        %v1615 = vpop.f32.mrf.mxu0
        %1616 = vmatprep.mubr.f32.mxu0 %v1362
        %1617 = vmatmul.mubr.f32.gmra.mxu0 %v1089
        %v1618 = vpop.f32.mrf.mxu0
        %v1619 = vadd.f32 0.0, %v1618
        %v1620 = vpop.f32.mrf.mxu0
        %1621 = vmatprep.mubr.f32.mxu0 %v1367
        %1622 = vmatmul.mubr.f32.gmra.mxu0 %v1094
        %v1623 = vpop.f32.mrf.mxu0
        %v1624 = vadd.f32 0.0, %v1623
        %v1625 = vpop.f32.mrf.mxu0
        %1626 = vdwg.mxu0
        %v1627 = vtanh.pop %v1469
        %v1628 = vtanh.pop %v1474
        %v1629 = vtanh.pop %v1479
        %v1630 = vtanh.pop %v1484
        %v1631 = vtanh.pop %v1489
        %v1632 = vtanh.pop %v1494
        %v1633 = vtanh.pop %v1499
        %v1634 = vtanh.pop %v1504
        %v1635 = vtanh.pop %v1509
        %v1636 = vtanh.pop %v1514
        %v1637 = vtanh.pop %v1519
        %v1638 = vtanh.pop %v1524
        %v1639 = vtanh.pop %v1529
        %v1640 = vtanh.pop %v1534
        %v1641 = vtanh.pop %v1539
        %v1642 = vtanh.pop %v1544
        %v1643 = vtanh.pop %v1549
        %v1644 = vtanh.pop %v1554
        %v1645 = vtanh.pop %v1559
        %v1646 = vtanh.pop %v1564
        %v1647 = vtanh.pop %v1569
        %v1648 = vtanh.pop %v1574
        %v1649 = vtanh.pop %v1579
        %v1650 = vtanh.pop %v1584
        %v1651 = vtanh.pop %v1589
        %v1652 = vtanh.pop %v1594
        %v1653 = vtanh.pop %v1599
        %v1654 = vtanh.pop %v1604
        %v1655 = vtanh.pop %v1609
        %v1656 = vtanh.pop %v1614
        %v1657 = vtanh.pop %v1619
        %v1658 = vtanh.pop %v1624
        %1659 = vmatprep.subr.mxu0 0.0
        %1660 = vmatpush1.msra.mxu0 %v1385
        %1661 = vmatprep.subr.mxu0 0.0
        %1662 = vmatpush1.msra.mxu0 %v1384
        %1663 = vmatprep.subr.mxu0 0.0
        %1664 = vmatpush1.msra.mxu0 %v1383
        %1665 = vmatprep.subr.mxu0 0.0
        %1666 = vmatpush1.msra.mxu0 %v1382
        %1667 = vmatprep.subr.mxu0 0.0
        %1668 = vmatpush1.msra.mxu0 %v1381
        %1669 = vmatprep.subr.mxu0 0.0
        %1670 = vmatpush1.msra.mxu0 %v1380
        %1671 = vmatprep.subr.mxu0 0.0
        %1672 = vmatpush1.msra.mxu0 %v1379
        %1673 = vmatprep.subr.mxu0 0.0
        %1674 = vmatpush1.msra.mxu0 %v1378
        %1675 = vmatprep.subr.mxu0 0.0
        %1676 = vmatpush1.msra.mxu0 %v1377
        %1677 = vmatprep.subr.mxu0 0.0
        %1678 = vmatpush1.msra.mxu0 %v1376
        %1679 = vmatprep.subr.mxu0 0.0
        %1680 = vmatpush1.msra.mxu0 %v1375
        %1681 = vmatprep.subr.mxu0 0.0
        %1682 = vmatpush1.msra.mxu0 %v1374
        %1683 = vmatprep.subr.mxu0 0.0
        %1684 = vmatpush1.msra.mxu0 %v1373
        %1685 = vmatprep.subr.mxu0 0.0
        %1686 = vmatpush1.msra.mxu0 %v1372
        %1687 = vmatprep.subr.mxu0 0.0
        %1688 = vmatpush1.msra.mxu0 %v1371
        %1689 = vmatprep.subr.mxu0 0.0
        %1690 = vmatpush1.msra.mxu0 %v1370
        %1691 = vmatprep.subr.mxu0 0.0
        %1692 = vmatpush2.msra.mxu0 %v1401
        %1693 = vmatprep.subr.mxu0 0.0
        %1694 = vmatpush2.msra.mxu0 %v1400
        %1695 = vmatprep.subr.mxu0 0.0
        %1696 = vmatpush2.msra.mxu0 %v1399
        %1697 = vmatprep.subr.mxu0 0.0
        %1698 = vmatpush2.msra.mxu0 %v1398
        %1699 = vmatprep.subr.mxu0 0.0
        %1700 = vmatpush2.msra.mxu0 %v1397
        %1701 = vmatprep.subr.mxu0 0.0
        %1702 = vmatpush2.msra.mxu0 %v1396
        %1703 = vmatprep.subr.mxu0 0.0
        %1704 = vmatpush2.msra.mxu0 %v1395
        %1705 = vmatprep.subr.mxu0 0.0
        %1706 = vmatpush2.msra.mxu0 %v1394
        %1707 = vmatprep.subr.mxu0 0.0
        %1708 = vmatpush2.msra.mxu0 %v1393
        %1709 = vmatprep.subr.mxu0 0.0
        %1710 = vmatpush2.msra.mxu0 %v1392
        %1711 = vmatprep.subr.mxu0 0.0
        %1712 = vmatpush2.msra.mxu0 %v1391
        %1713 = vmatprep.subr.mxu0 0.0
        %1714 = vmatpush2.msra.mxu0 %v1390
        %1715 = vmatprep.subr.mxu0 0.0
        %1716 = vmatpush2.msra.mxu0 %v1389
        %1717 = vmatprep.subr.mxu0 0.0
        %1718 = vmatpush2.msra.mxu0 %v1388
        %1719 = vmatprep.subr.mxu0 0.0
        %1720 = vmatpush2.msra.mxu0 %v1387
        %1721 = vmatprep.subr.mxu0 0.0
        %1722 = vmatpush2.msra.mxu0 %v1386
        %1723 = vmatprep.mubr.f32.mxu0 %v1643
        %1724 = vmatmul.mubr.f32.gmra.mxu0 %v1627
        %v1725 = vpop.f32.mrf.mxu0
        %v1726 = vadd.f32 0.0, %v1725
        %v1727 = vpop.f32.mrf.mxu0
        %1728 = vmatprep.mubr.f32.mxu0 %v1644
        %1729 = vmatmul.mubr.f32.gmra.mxu0 %v1628
        %v1730 = vpop.f32.mrf.mxu0
        %v1731 = vadd.f32 0.0, %v1730
        %v1732 = vpop.f32.mrf.mxu0
        %1733 = vmatprep.mubr.f32.mxu0 %v1645
        %1734 = vmatmul.mubr.f32.gmra.mxu0 %v1629
        %v1735 = vpop.f32.mrf.mxu0
        %v1736 = vadd.f32 0.0, %v1735
        %v1737 = vpop.f32.mrf.mxu0
        %1738 = vmatprep.mubr.f32.mxu0 %v1646
        %1739 = vmatmul.mubr.f32.gmra.mxu0 %v1630
        %v1740 = vpop.f32.mrf.mxu0
        %v1741 = vadd.f32 0.0, %v1740
        %v1742 = vpop.f32.mrf.mxu0
        %1743 = vmatprep.mubr.f32.mxu0 %v1647
        %1744 = vmatmul.mubr.f32.gmra.mxu0 %v1631
        %v1745 = vpop.f32.mrf.mxu0
        %v1746 = vadd.f32 0.0, %v1745
        %v1747 = vpop.f32.mrf.mxu0
        %1748 = vmatprep.mubr.f32.mxu0 %v1648
        %1749 = vmatmul.mubr.f32.gmra.mxu0 %v1632
        %v1750 = vpop.f32.mrf.mxu0
        %v1751 = vadd.f32 0.0, %v1750
        %v1752 = vpop.f32.mrf.mxu0
        %1753 = vmatprep.mubr.f32.mxu0 %v1649
        %1754 = vmatmul.mubr.f32.gmra.mxu0 %v1633
        %v1755 = vpop.f32.mrf.mxu0
        %v1756 = vadd.f32 0.0, %v1755
        %v1757 = vpop.f32.mrf.mxu0
        %1758 = vmatprep.mubr.f32.mxu0 %v1650
        %1759 = vmatmul.mubr.f32.gmra.mxu0 %v1634
        %v1760 = vpop.f32.mrf.mxu0
        %v1761 = vadd.f32 0.0, %v1760
        %v1762 = vpop.f32.mrf.mxu0
        %1763 = vmatprep.mubr.f32.mxu0 %v1651
        %1764 = vmatmul.mubr.f32.gmra.mxu0 %v1635
        %v1765 = vpop.f32.mrf.mxu0
        %v1766 = vadd.f32 0.0, %v1765
        %v1767 = vpop.f32.mrf.mxu0
        %1768 = vmatprep.mubr.f32.mxu0 %v1652
        %1769 = vmatmul.mubr.f32.gmra.mxu0 %v1636
        %v1770 = vpop.f32.mrf.mxu0
        %v1771 = vadd.f32 0.0, %v1770
        %v1772 = vpop.f32.mrf.mxu0
        %1773 = vmatprep.mubr.f32.mxu0 %v1653
        %1774 = vmatmul.mubr.f32.gmra.mxu0 %v1637
        %v1775 = vpop.f32.mrf.mxu0
        %v1776 = vadd.f32 0.0, %v1775
        %v1777 = vpop.f32.mrf.mxu0
        %1778 = vmatprep.mubr.f32.mxu0 %v1654
        %1779 = vmatmul.mubr.f32.gmra.mxu0 %v1638
        %v1780 = vpop.f32.mrf.mxu0
        %v1781 = vadd.f32 0.0, %v1780
        %v1782 = vpop.f32.mrf.mxu0
        %1783 = vmatprep.mubr.f32.mxu0 %v1655
        %1784 = vmatmul.mubr.f32.gmra.mxu0 %v1639
        %v1785 = vpop.f32.mrf.mxu0
        %v1786 = vadd.f32 0.0, %v1785
        %v1787 = vpop.f32.mrf.mxu0
        %1788 = vmatprep.mubr.f32.mxu0 %v1656
        %1789 = vmatmul.mubr.f32.gmra.mxu0 %v1640
        %v1790 = vpop.f32.mrf.mxu0
        %v1791 = vadd.f32 0.0, %v1790
        %v1792 = vpop.f32.mrf.mxu0
        %1793 = vmatprep.mubr.f32.mxu0 %v1657
        %1794 = vmatmul.mubr.f32.gmra.mxu0 %v1641
        %v1795 = vpop.f32.mrf.mxu0
        %v1796 = vadd.f32 0.0, %v1795
        %v1797 = vpop.f32.mrf.mxu0
        %1798 = vmatprep.mubr.f32.mxu0 %v1658
        %1799 = vmatmul.mubr.f32.gmra.mxu0 %v1642
        %v1800 = vpop.f32.mrf.mxu0
        %v1801 = vadd.f32 0.0, %v1800
        %v1802 = vpop.f32.mrf.mxu0
        %1803 = vdwg.mxu0
        %v1804 = vtanh.pop %v1726
        %v1805 = vtanh.pop %v1731
        %v1806 = vtanh.pop %v1736
        %v1807 = vtanh.pop %v1741
        %v1808 = vtanh.pop %v1746
        %v1809 = vtanh.pop %v1751
        %v1810 = vtanh.pop %v1756
        %v1811 = vtanh.pop %v1761
        %v1812 = vtanh.pop %v1766
        %v1813 = vtanh.pop %v1771
        %v1814 = vtanh.pop %v1776
        %v1815 = vtanh.pop %v1781
        %v1816 = vtanh.pop %v1786
        %v1817 = vtanh.pop %v1791
        %v1818 = vtanh.pop %v1796
        %v1819 = vtanh.pop %v1801
        %v1820 = vld [vmem:[%s214] sm:$0xff]
        %v1821 = vld [vmem:[%s214 + $0x8] sm:$0xff]
        %v1822 = vld [vmem:[%s214 + $0x10] sm:$0xff]
        %v1823 = vld [vmem:[%s214 + $0x18] sm:$0xff]
        %v1824 = vld [vmem:[%s214 + $0x20] sm:$0xff]
        %v1825 = vld [vmem:[%s214 + $0x28] sm:$0xff]
        %v1826 = vld [vmem:[%s214 + $0x30] sm:$0xff]
        %v1827 = vld [vmem:[%s214 + $0x38] sm:$0xff]
        %v1828 = vld [vmem:[%s214 + $0x40] sm:$0xff]
        %v1829 = vld [vmem:[%s214 + $0x48] sm:$0xff]
        %v1830 = vld [vmem:[%s214 + $0x50] sm:$0xff]
        %v1831 = vld [vmem:[%s214 + $0x58] sm:$0xff]
        %v1832 = vld [vmem:[%s214 + $0x60] sm:$0xff]
        %v1833 = vld [vmem:[%s214 + $0x68] sm:$0xff]
        %v1834 = vld [vmem:[%s214 + $0x70] sm:$0xff]
        %v1835 = vld [vmem:[%s214 + $0x78] sm:$0xff]
        %v1836 = vsub.f32 %v1804, %v1820
        %v1837 = vsub.f32 %v1805, %v1821
        %v1838 = vsub.f32 %v1806, %v1822
        %v1839 = vsub.f32 %v1807, %v1823
        %v1840 = vsub.f32 %v1808, %v1824
        %v1841 = vsub.f32 %v1809, %v1825
        %v1842 = vsub.f32 %v1810, %v1826
        %v1843 = vsub.f32 %v1811, %v1827
        %v1844 = vsub.f32 %v1812, %v1828
        %v1845 = vsub.f32 %v1813, %v1829
        %v1846 = vsub.f32 %v1814, %v1830
        %v1847 = vsub.f32 %v1815, %v1831
        %v1848 = vsub.f32 %v1816, %v1832
        %v1849 = vsub.f32 %v1817, %v1833
        %v1850 = vsub.f32 %v1818, %v1834
        %v1851 = vsub.f32 %v1819, %v1835
        %v1852 = vand.u32 2147483647, %v1836
        %v1853 = vand.u32 2147483647, %v1837
        %v1854 = vand.u32 2147483647, %v1838
        %v1855 = vand.u32 2147483647, %v1839
        %v1856 = vand.u32 2147483647, %v1840
        %v1857 = vand.u32 2147483647, %v1841
        %v1858 = vand.u32 2147483647, %v1842
        %v1859 = vand.u32 2147483647, %v1843
        %v1860 = vand.u32 2147483647, %v1844
        %v1861 = vand.u32 2147483647, %v1845
        %v1862 = vand.u32 2147483647, %v1846
        %v1863 = vand.u32 2147483647, %v1847
        %v1864 = vand.u32 2147483647, %v1848
        %v1865 = vand.u32 2147483647, %v1849
        %v1866 = vand.u32 2147483647, %v1850
        %v1867 = vand.u32 2147483647, %v1851
        %1868 = vadd.xlane.f32.xlu0 %v1852
        %v1869 = vpop.xlane.xlu0 %1868
        %1870 = vadd.xlane.f32.xlu0 %v1853
        %v1871 = vpop.xlane.xlu0 %1870
        %1872 = vadd.xlane.f32.xlu0 %v1854
        %v1873 = vpop.xlane.xlu0 %1872
        %1874 = vadd.xlane.f32.xlu0 %v1855
        %v1875 = vpop.xlane.xlu0 %1874
        %1876 = vadd.xlane.f32.xlu0 %v1856
        %v1877 = vpop.xlane.xlu0 %1876
        %1878 = vadd.xlane.f32.xlu0 %v1857
        %v1879 = vpop.xlane.xlu0 %1878
        %1880 = vadd.xlane.f32.xlu0 %v1858
        %v1881 = vpop.xlane.xlu0 %1880
        %1882 = vadd.xlane.f32.xlu0 %v1859
        %v1883 = vpop.xlane.xlu0 %1882
        %1884 = vadd.xlane.f32.xlu0 %v1860
        %v1885 = vpop.xlane.xlu0 %1884
        %1886 = vadd.xlane.f32.xlu0 %v1861
        %v1887 = vpop.xlane.xlu0 %1886
        %1888 = vadd.xlane.f32.xlu0 %v1862
        %v1889 = vpop.xlane.xlu0 %1888
        %1890 = vadd.xlane.f32.xlu0 %v1863
        %v1891 = vpop.xlane.xlu0 %1890
        %1892 = vadd.xlane.f32.xlu0 %v1864
        %v1893 = vpop.xlane.xlu0 %1892
        %1894 = vadd.xlane.f32.xlu0 %v1865
        %v1895 = vpop.xlane.xlu0 %1894
        %1896 = vadd.xlane.f32.xlu0 %v1866
        %v1897 = vpop.xlane.xlu0 %1896
        %1898 = vadd.xlane.f32.xlu0 %v1867
        %v1899 = vpop.xlane.xlu0 %1898
        %vm1900 = vcmask 7168
        %1901 = vst.msk [vmem:[%s255] sm:$0xff] %vm1900, %v1869
        %1902 = vst.msk [vmem:[%s255 + $0x8] sm:$0xff] %vm1900, %v1871
        %1903 = vst.msk [vmem:[%s255 + $0x10] sm:$0xff] %vm1900, %v1873
        %1904 = vst.msk [vmem:[%s255 + $0x18] sm:$0xff] %vm1900, %v1875
        %1905 = vst.msk [vmem:[%s255 + $0x20] sm:$0xff] %vm1900, %v1877
        %1906 = vst.msk [vmem:[%s255 + $0x28] sm:$0xff] %vm1900, %v1879
        %1907 = vst.msk [vmem:[%s255 + $0x30] sm:$0xff] %vm1900, %v1881
        %1908 = vst.msk [vmem:[%s255 + $0x38] sm:$0xff] %vm1900, %v1883
        %1909 = vst.msk [vmem:[%s255 + $0x40] sm:$0xff] %vm1900, %v1885
        %1910 = vst.msk [vmem:[%s255 + $0x48] sm:$0xff] %vm1900, %v1887
        %1911 = vst.msk [vmem:[%s255 + $0x50] sm:$0xff] %vm1900, %v1889
        %1912 = vst.msk [vmem:[%s255 + $0x58] sm:$0xff] %vm1900, %v1891
        %1913 = vst.msk [vmem:[%s255 + $0x60] sm:$0xff] %vm1900, %v1893
        %1914 = vst.msk [vmem:[%s255 + $0x68] sm:$0xff] %vm1900, %v1895
        %1915 = vst.msk [vmem:[%s255 + $0x70] sm:$0xff] %vm1900, %v1897
        %1916 = vst.msk [vmem:[%s255 + $0x78] sm:$0xff] %vm1900, %v1899
        %s1917 = smul.u32 16, %s19
        %p1918 = scmp.lt.s32.totalorder %s1917, 31
        %s1919 = scalar_select %p1918, %s1917, 31
        %s1920 = smul.addr %s1919, 8
        %s1921 = scalar_lea.vmem %s4, %s1920
        // Predicated region
        $region45: #{tpu_custom_call.1} parent=35 // pred_check
          %p1922 = pneg %p131
        $region46: #{tpu_custom_call.1} parent=35 // pred_check_branch
          %1924 = sbr.rel (%p1922) target = $region48
        $region47: #{tpu_custom_call.1} parent=35 // pred_region
          %s1925 = smul.u32 16, %s19
        $region48: #{tpu_custom_call.1} parent=35 // pred_fallthru
          _
      $region36: #{tpu_custom_call.1} parent=5 // pred_fallthru
        _
      %p1926 = scmp.le.s32.totalorder 2, %s14
      // Predicated region
      $region49: #{tpu_custom_call.1} parent=5 // pred_check
        %p1927 = pneg %p1926
      $region50: #{tpu_custom_call.1} parent=5 // pred_check_branch
        %1929 = sbr.rel (%p1927) target = $region52
      $region51: #{tpu_custom_call.1} parent=5 // pred_region
        %s1930 = ssub.s32 %s14, 2
        // Predicated region
        $region53: #{tpu_custom_call.1} parent=51 // pred_check
          %p1931 = pneg %p137
        $region54: #{tpu_custom_call.1} parent=51 // pred_check_branch
          %1933 = sbr.rel (%p1931) target = $region56
        $region55: #{tpu_custom_call.1} parent=51 // pred_region
          %s1934 = smul.u32 16, %s20
          %p1935 = scmp.lt.s32.totalorder %s1934, 31
          %s1936 = scalar_select %p1935, %s1934, 31
          %s1937 = smul.addr %s1936, 8
          %s1938 = scalar_lea.vmem %s4, %s1937
        $region56: #{tpu_custom_call.1} parent=51 // pred_fallthru
          _
      $region52: #{tpu_custom_call.1} parent=5 // pred_fallthru
        _
    $region6: #{tpu_custom_call.1} parent=1 // loop_footer
      %s18 = sadd.s32 1, %s14
    $region7: #{tpu_custom_call.1} parent=1 // loop_footer_branch
      %13 = sbr.rel target = $region3
    $region8: #{tpu_custom_call.1} parent=1 // loop_exit
      _
    %1939 = vsyncpa [#allocation3], 1
    %s1940 = scalar_lea.sflag [#allocation3], 1
    %1941 = vsyncpa %s1940, 1
    %1942 = vsyncpa [#allocation5], 1
    %s1943 = scalar_lea.sflag [#allocation5], 1
    %1944 = vsyncpa %s1943, 1

</llo_original>
